<compile_context>
chip_gen: v6e
topology: v6e:2x2x1
jax: 0.10.0
libtpu: 0.0.40
codegen_flags: <defaults>
</compile_context>

<pallas_src>
import functools

import jax
import jax.numpy as jnp
from jax.experimental import pallas as pl
from jax.experimental.pallas import tpu as pltpu


def _sigmoid(z):
    # Exact, saturating sigmoid via the tanh identity (EUP tanh + cheap VALU).
    return 0.5 * jnp.tanh(0.5 * z) + 0.5


def _autoencoder_kernel(x_ref, w1_ref, w2_ref, w3_ref, w4_ref, b_ref, o_ref,
                        *, widths):
    """Push one (TR, pack*D) row-block of the packed input through all layers.

    Each 128-lane row of x_ref holds `pack` consecutive batch samples
    (pack = 128 // D when D divides 128, else 1); the weights were expanded to
    block-diagonal form in the wrapper, so every matmul / activation / store is
    lane-dense and no transpose is needed anywhere.
    """
    wa, wb, wc, wd = widths            # pack*8, pack*4, pack*8, pack*D

    def dot(a, w_ref):
        return jnp.dot(a, w_ref[...], preferred_element_type=jnp.float32,
                       precision=jax.lax.Precision.HIGHEST)

    x = x_ref[...].astype(jnp.float32)                        # (TR, pack*D)
    h = _sigmoid(dot(x, w1_ref) + b_ref[0:1, :wa])            # (TR, pack*8)
    h = jnp.maximum(dot(h, w2_ref) + b_ref[1:2, :wb], 0.0)    # (TR, pack*4)
    h = jnp.maximum(dot(h, w3_ref) + b_ref[2:3, :wc], 0.0)    # (TR, pack*8)
    y = _sigmoid(dot(h, w4_ref) + b_ref[3:4, :wd])            # (TR, pack*D)
    o_ref[...] = y.astype(o_ref.dtype)                        # lane-dense store


def _chip_budgets():
    """(block_bytes_target, vmem_limit_bytes), sized per TPU generation."""
    try:
        vmem = getattr(pltpu.get_tpu_info(), "vmem_capacity_bytes", None)
    except Exception:
        vmem = None
    if vmem is not None and vmem >= 96 * 1024 * 1024:
        # v5e / v6e: 128 MiB physical VMEM -> bigger blocks, fewer grid steps.
        return 8 * 1024 * 1024, 64 * 1024 * 1024
    # v7x-class (64 MiB VMEM per TC) or unknown: stay conservative.
    return 4 * 1024 * 1024, 32 * 1024 * 1024


def _pick_block_rows(num_rows, row_lanes, target_bytes):
    """Rows per block: ~target_bytes per block, multiple of 8 (sublane tile)."""
    rows = max(8, (target_bytes // (row_lanes * 4)) // 8 * 8)
    if rows >= num_rows:
        # Whole problem fits in one block.  If it is big enough, still split it
        # in two so dual-TensorCore chips (v7x) get one block per core.
        half = ((-(-num_rows // 2)) + 7) // 8 * 8
        if num_rows >= 16 and half < num_rows:
            return half
        return num_rows
    return rows


def autoencoder_forward(x, params, *, block_rows=None):
    """x: [B, D] float32.  params: PyTorch-layout weights (out, in), biases (out,)."""
    B, D = x.shape
    w1, b1 = params["w1"], params["b1"]   # (8, D), (8,)
    w2, b2 = params["w2"], params["b2"]   # (4, 8), (4,)
    w3, b3 = params["w3"], params["b3"]   # (8, 4), (8,)
    w4, b4 = params["w4"], params["b4"]   # (D, 8), (D,)

    # Lane packing: view [B, D] as [B/pack, pack*D] (free row-major reshape) so
    # blocks are 128-lane dense.  Fall back to pack=1 (plain rows) otherwise.
    pack = 128 // D if (D < 128 and 128 % D == 0) else 1
    if pack > 1 and B % pack != 0:
        pack = 1
    R, L = B // pack, pack * D

    # Block-diagonal weights implement the per-sample Linear layers directly in
    # the packed-lane layout (pack == 1 -> plain transposed weights).
    eye = jnp.eye(pack, dtype=jnp.float32)
    w1p = jnp.kron(eye, w1.T)         # (pack*D, pack*8)
    w2p = jnp.kron(eye, w2.T)         # (pack*8, pack*4)
    w3p = jnp.kron(eye, w3.T)         # (pack*4, pack*8)
    w4p = jnp.kron(eye, w4.T)         # (pack*8, pack*D)

    widths = (pack * 8, pack * 4, pack * 8, pack * D)
    lmax = max(widths)

    def _bias_row(b):
        t = jnp.tile(b, pack).astype(jnp.float32)
        return jnp.pad(t, (0, lmax - t.shape[0]))

    # Single VMEM-resident bias slab (4 rows, one per layer) instead of four
    # separately double-buffered tiny operands.
    b_slab = jnp.stack([_bias_row(b1), _bias_row(b2), _bias_row(b3), _bias_row(b4)])

    block_bytes, vmem_limit = _chip_budgets()
    if block_rows is None:
        TR = _pick_block_rows(R, L, block_bytes)
    else:
        TR = min(int(block_rows), R)
        if TR < R:
            TR = max(8, (TR // 8) * 8)
    nb = pl.cdiv(R, TR)

    xr = x.reshape(R, L)              # bitcast reshape, no data movement

    def resident(a):
        # Constant block index -> DMA'd once, VMEM-resident across all steps.
        return pl.BlockSpec(a.shape, lambda i: (0, 0))

    kernel = functools.partial(_autoencoder_kernel, widths=widths)

    yr = pl.pallas_call(
        kernel,
        out_shape=jax.ShapeDtypeStruct((R, L), x.dtype),
        grid_spec=pltpu.PrefetchScalarGridSpec(
            num_scalar_prefetch=0,
            grid=(nb,),                                      # batch-row blocks
            in_specs=[
                pl.BlockSpec((TR, L), lambda i: (i, 0)),     # packed x rows
                resident(w1p), resident(w2p), resident(w3p), resident(w4p),
                resident(b_slab),
            ],
            out_specs=pl.BlockSpec((TR, L), lambda i: (i, 0)),
        ),
        compiler_params=pltpu.CompilerParams(
            dimension_semantics=("parallel",),   # independent row blocks
            vmem_limit_bytes=vmem_limit,
        ),
    )(xr, w1p, w2p, w3p, w4p, b_slab)

    return yr.reshape(B, D)


def init_params(key, input_dim):
    """PyTorch nn.Linear layout: W is (out, in), b is (out,), U(-1/sqrt(fan_in), .)."""
    keys = jax.random.split(key, 8)

    def linear(kw, kb, fan_in, fan_out):
        bound = 1.0 / jnp.sqrt(jnp.float32(fan_in))
        w = jax.random.uniform(kw, (fan_out, fan_in), jnp.float32, -bound, bound)
        b = jax.random.uniform(kb, (fan_out,), jnp.float32, -bound, bound)
        return w, b

    w1, b1 = linear(keys[0], keys[1], input_dim, 8)
    w2, b2 = linear(keys[2], keys[3], 8, 4)
    w3, b3 = linear(keys[4], keys[5], 4, 8)
    w4, b4 = linear(keys[6], keys[7], 8, input_dim)
    return {"w1": w1, "b1": b1, "w2": w2, "b2": b2,
            "w3": w3, "b3": b3, "w4": w4, "b4": b4}


def reference_forward(x, p):
    h = jax.nn.sigmoid(x @ p["w1"].T + p["b1"])
    h = jax.nn.relu(h @ p["w2"].T + p["b2"])
    h = jax.nn.relu(h @ p["w3"].T + p["b3"])
    return jax.nn.sigmoid(h @ p["w4"].T + p["b4"])


def _check(out, ref, tag):
    assert out.shape == ref.shape, f"{tag}: shape mismatch {out.shape} vs {ref.shape}"
    assert jnp.allclose(out, ref, atol=2e-3, rtol=2e-3), \
        f"{tag}: mismatch vs pure-JAX reference"


if __name__ == "__main__":
    # f32-accurate matmuls for the reference too, so the comparison is not
    # dominated by default bf16 matmul truncation.
    jax.config.update("jax_default_matmul_precision", "highest")

    key = jax.random.PRNGKey(0)
    k_x, k_p, k_x2, k_p2 = jax.random.split(key, 4)

    # 1) Small case consistent with the module: batch=64, input_dim=32.
    batch, input_dim = 64, 32
    x = jax.random.normal(k_x, (batch, input_dim), jnp.float32)
    params = init_params(k_p, input_dim)
    out = jax.block_until_ready(autoencoder_forward(x, params))
    _check(out, reference_forward(x, params), "packed path (B=64, D=32)")

    # 2) Multi-block grid: several batch blocks, weights stay VMEM-resident.
    x2 = jax.random.normal(k_x2, (512, input_dim), jnp.float32)
    out2 = jax.block_until_ready(autoencoder_forward(x2, params, block_rows=32))
    _check(out2, reference_forward(x2, params), "multi-block path (B=512)")

    # 3) Batch not a multiple of the block: exercises boundary masking of the
    #    final partial block (review correctness concern).
    x3 = jax.random.normal(k_x, (100, input_dim), jnp.float32)
    out3 = jax.block_until_ready(autoencoder_forward(x3, params))
    _check(out3, reference_forward(x3, params), "partial-block path (B=100)")

    # 4) D that does not divide 128 -> pack=1 row-major fallback path.
    input_dim2 = 20
    params2 = init_params(k_p2, input_dim2)
    x4 = jax.random.normal(k_x2, (24, input_dim2), jnp.float32)
    out4 = jax.block_until_ready(autoencoder_forward(x4, params2))
    _check(out4, reference_forward(x4, params2), "pack=1 fallback (D=20)")

    print("KERNEL_OK")
</pallas_src>

<mosaic_0001>
module attributes {stable_mosaic.version = 11 : i64} {
  func.func @_autoencoder_kernel(%arg0: i32, %arg1: memref<8x128xf32, #tpu.memory_space<vmem>>, %arg2: memref<128x32xf32, #tpu.memory_space<vmem>>, %arg3: memref<32x16xf32, #tpu.memory_space<vmem>>, %arg4: memref<16x32xf32, #tpu.memory_space<vmem>>, %arg5: memref<32x128xf32, #tpu.memory_space<vmem>>, %arg6: memref<4x128xf32, #tpu.memory_space<vmem>>, %arg7: memref<8x128xf32, #tpu.memory_space<vmem>>) attributes {dimension_semantics = [#tpu.dimension_semantics<parallel>], iteration_bounds = array<i64: 2>, scalar_prefetch = 0 : i64, scratch_operands = 0 : i64, tpu.core_type = #tpu.core_type<tc>, window_params = [{transform_indices = @transform_0, window_bounds = array<i64: 8, 128>}, {pipeline_mode = #tpu.pipeline_mode<synchronous>, transform_indices = @transform_1, window_bounds = array<i64: 128, 32>}, {pipeline_mode = #tpu.pipeline_mode<synchronous>, transform_indices = @transform_2, window_bounds = array<i64: 32, 16>}, {pipeline_mode = #tpu.pipeline_mode<synchronous>, transform_indices = @transform_3, window_bounds = array<i64: 16, 32>}, {pipeline_mode = #tpu.pipeline_mode<synchronous>, transform_indices = @transform_4, window_bounds = array<i64: 32, 128>}, {pipeline_mode = #tpu.pipeline_mode<synchronous>, transform_indices = @transform_5, window_bounds = array<i64: 4, 128>}, {transform_indices = @transform_6, window_bounds = array<i64: 8, 128>}]} {
    %c0 = arith.constant 0 : index
    %c0_0 = arith.constant 0 : index
    %0 = vector.load %arg1[%c0, %c0_0] : memref<8x128xf32, #tpu.memory_space<vmem>>, vector<8x128xf32>
    %c0_1 = arith.constant 0 : index
    %c0_2 = arith.constant 0 : index
    %1 = vector.load %arg2[%c0_1, %c0_2] : memref<128x32xf32, #tpu.memory_space<vmem>>, vector<128x32xf32>
    %cst = arith.constant dense<0.000000e+00> : vector<8x32xf32>
    %2 = tpu.matmul %0, %1, %cst {dimension_numbers = #tpu.dot_dimension_numbers<[1], [0], [0], [1], [0, 0, 1, 1], [], []>, precision = #tpu.contract_precision<fp32>} : vector<8x128xf32>, vector<128x32xf32>, vector<8x32xf32> -> vector<8x32xf32>
    %c0_3 = arith.constant 0 : index
    %c0_4 = arith.constant 0 : index
    %3 = vector.load %arg6[%c0_3, %c0_4] : memref<4x128xf32, #tpu.memory_space<vmem>>, vector<1x32xf32>
    %4 = vector.broadcast %3 : vector<1x32xf32> to vector<8x32xf32>
    %5 = arith.addf %2, %4 : vector<8x32xf32>
    %cst_5 = arith.constant 5.000000e-01 : f32
    %6 = vector.broadcast %cst_5 : f32 to vector<8x32xf32>
    %7 = arith.mulf %6, %5 : vector<8x32xf32>
    %8 = math.tanh %7 : vector<8x32xf32>
    %cst_6 = arith.constant 5.000000e-01 : f32
    %9 = vector.broadcast %cst_6 : f32 to vector<8x32xf32>
    %10 = arith.mulf %9, %8 : vector<8x32xf32>
    %cst_7 = arith.constant 5.000000e-01 : f32
    %11 = vector.broadcast %cst_7 : f32 to vector<8x32xf32>
    %12 = arith.addf %10, %11 : vector<8x32xf32>
    %c0_8 = arith.constant 0 : index
    %c0_9 = arith.constant 0 : index
    %13 = vector.load %arg3[%c0_8, %c0_9] : memref<32x16xf32, #tpu.memory_space<vmem>>, vector<32x16xf32>
    %cst_10 = arith.constant dense<0.000000e+00> : vector<8x16xf32>
    %14 = tpu.matmul %12, %13, %cst_10 {dimension_numbers = #tpu.dot_dimension_numbers<[1], [0], [0], [1], [0, 0, 1, 1], [], []>, precision = #tpu.contract_precision<fp32>} : vector<8x32xf32>, vector<32x16xf32>, vector<8x16xf32> -> vector<8x16xf32>
    %c1 = arith.constant 1 : index
    %c0_11 = arith.constant 0 : index
    %15 = vector.load %arg6[%c1, %c0_11] : memref<4x128xf32, #tpu.memory_space<vmem>>, vector<1x16xf32>
    %16 = vector.broadcast %15 : vector<1x16xf32> to vector<8x16xf32>
    %17 = arith.addf %14, %16 : vector<8x16xf32>
    %cst_12 = arith.constant 0.000000e+00 : f32
    %18 = vector.broadcast %cst_12 : f32 to vector<8x16xf32>
    %19 = arith.maximumf %17, %18 : vector<8x16xf32>
    %c0_13 = arith.constant 0 : index
    %c0_14 = arith.constant 0 : index
    %20 = vector.load %arg4[%c0_13, %c0_14] : memref<16x32xf32, #tpu.memory_space<vmem>>, vector<16x32xf32>
    %cst_15 = arith.constant dense<0.000000e+00> : vector<8x32xf32>
    %21 = tpu.matmul %19, %20, %cst_15 {dimension_numbers = #tpu.dot_dimension_numbers<[1], [0], [0], [1], [0, 0, 1, 1], [], []>, precision = #tpu.contract_precision<fp32>} : vector<8x16xf32>, vector<16x32xf32>, vector<8x32xf32> -> vector<8x32xf32>
    %c2 = arith.constant 2 : index
    %c0_16 = arith.constant 0 : index
    %22 = vector.load %arg6[%c2, %c0_16] : memref<4x128xf32, #tpu.memory_space<vmem>>, vector<1x32xf32>
    %23 = vector.broadcast %22 : vector<1x32xf32> to vector<8x32xf32>
    %24 = arith.addf %21, %23 : vector<8x32xf32>
    %cst_17 = arith.constant 0.000000e+00 : f32
    %25 = vector.broadcast %cst_17 : f32 to vector<8x32xf32>
    %26 = arith.maximumf %24, %25 : vector<8x32xf32>
    %c0_18 = arith.constant 0 : index
    %c0_19 = arith.constant 0 : index
    %27 = vector.load %arg5[%c0_18, %c0_19] : memref<32x128xf32, #tpu.memory_space<vmem>>, vector<32x128xf32>
    %cst_20 = arith.constant dense<0.000000e+00> : vector<8x128xf32>
    %28 = tpu.matmul %26, %27, %cst_20 {dimension_numbers = #tpu.dot_dimension_numbers<[1], [0], [0], [1], [0, 0, 1, 1], [], []>, precision = #tpu.contract_precision<fp32>} : vector<8x32xf32>, vector<32x128xf32>, vector<8x128xf32> -> vector<8x128xf32>
    %c3 = arith.constant 3 : index
    %c0_21 = arith.constant 0 : index
    %29 = vector.load %arg6[%c3, %c0_21] : memref<4x128xf32, #tpu.memory_space<vmem>>, vector<1x128xf32>
    %30 = vector.broadcast %29 : vector<1x128xf32> to vector<8x128xf32>
    %31 = arith.addf %28, %30 : vector<8x128xf32>
    %cst_22 = arith.constant 5.000000e-01 : f32
    %32 = vector.broadcast %cst_22 : f32 to vector<8x128xf32>
    %33 = arith.mulf %32, %31 : vector<8x128xf32>
    %34 = math.tanh %33 : vector<8x128xf32>
    %cst_23 = arith.constant 5.000000e-01 : f32
    %35 = vector.broadcast %cst_23 : f32 to vector<8x128xf32>
    %36 = arith.mulf %35, %34 : vector<8x128xf32>
    %cst_24 = arith.constant 5.000000e-01 : f32
    %37 = vector.broadcast %cst_24 : f32 to vector<8x128xf32>
    %38 = arith.addf %36, %37 : vector<8x128xf32>
    %c0_25 = arith.constant 0 : index
    %c0_26 = arith.constant 0 : index
    %39 = vector.load %arg7[%c0_25, %c0_26] : memref<8x128xf32, #tpu.memory_space<vmem>>, vector<8x128xf32>
    tpu.vector_store %arg7[%c0_25, %c0_26], %38 {strides = array<i32>} : memref<8x128xf32, #tpu.memory_space<vmem>>, vector<8x128xf32>,
    return
  }
  func.func @transform_0(%arg0: i32) -> (i32, i32) {
    %c0_i32 = arith.constant 0 : i32
    %c0_i32_0 = arith.constant 0 : i32
    return %arg0, %c0_i32 : i32, i32
  }
  func.func @transform_1(%arg0: i32) -> (i32, i32) {
    %c0_i32 = arith.constant 0 : i32
    %c0_i32_0 = arith.constant 0 : i32
    %c0_i32_1 = arith.constant 0 : i32
    return %c0_i32, %c0_i32_0 : i32, i32
  }
  func.func @transform_2(%arg0: i32) -> (i32, i32) {
    %c0_i32 = arith.constant 0 : i32
    %c0_i32_0 = arith.constant 0 : i32
    %c0_i32_1 = arith.constant 0 : i32
    return %c0_i32, %c0_i32_0 : i32, i32
  }
  func.func @transform_3(%arg0: i32) -> (i32, i32) {
    %c0_i32 = arith.constant 0 : i32
    %c0_i32_0 = arith.constant 0 : i32
    %c0_i32_1 = arith.constant 0 : i32
    return %c0_i32, %c0_i32_0 : i32, i32
  }
  func.func @transform_4(%arg0: i32) -> (i32, i32) {
    %c0_i32 = arith.constant 0 : i32
    %c0_i32_0 = arith.constant 0 : i32
    %c0_i32_1 = arith.constant 0 : i32
    return %c0_i32, %c0_i32_0 : i32, i32
  }
  func.func @transform_5(%arg0: i32) -> (i32, i32) {
    %c0_i32 = arith.constant 0 : i32
    %c0_i32_0 = arith.constant 0 : i32
    %c0_i32_1 = arith.constant 0 : i32
    return %c0_i32, %c0_i32_0 : i32, i32
  }
  func.func @transform_6(%arg0: i32) -> (i32, i32) {
    %c0_i32 = arith.constant 0 : i32
    %c0_i32_0 = arith.constant 0 : i32
    return %arg0, %c0_i32 : i32, i32
  }
}

</mosaic_0001>

<llo_original>
// kernel: tpu_custom_call.1
$region0: #{tpu_custom_call.1}
  #allocation0 [shape = 'u32[]', space=smem, size = 0x4, offset = 0x4, fixed_abs, tag = 'smem constant byte address 0x4 - core index']
  #allocation1 [shape = 'u32[144,128]{1,0:T(1,128)}', space=vmem, size = 0x12000, scoped, tag = 'internal scratch']
  %s0 = inlined_call_operand.vmem [shape: f32[16,128], index: 0, kind: input, shape index: {}]
  %s1 = inlined_call_operand.vmem [shape: f32[128,32], index: 1, kind: input, shape index: {}]
  %s2 = inlined_call_operand.vmem [shape: f32[32,16], index: 2, kind: input, shape index: {}]
  %s3 = inlined_call_operand.vmem [shape: f32[16,32], index: 3, kind: input, shape index: {}]
  %s4 = inlined_call_operand.vmem [shape: f32[32,128], index: 4, kind: input, shape index: {}]
  %s5 = inlined_call_operand.vmem [shape: f32[4,128], index: 5, kind: input, shape index: {}]
  %s6 = inlined_call_operand.hbm [shape: f32[16,128], index: 6, kind: output, shape index: {}]
  %s7 = sld [smem:[#allocation0]]
  $region57: #{tpu_custom_call.1} parent=0
    _
  %s9 = ssub.s32 1, %s7
  %s10 = scalar_select 0, %s9, %s7
  $region1: #{tpu_custom_call.1} parent=0
    #allocation2 [shape = 'u8[8192]{0}', space=vmem, size = 0x2000, scoped, tag = 'output window, operand 0']
    #allocation3 [shape = 's32[2]{0}', space=sflag, size = 0x8, scoped, tag = 'scoped memory for tpu_custom_call.1']
    %11 = vsyncpa [#allocation3], 0
    %s12 = scalar_lea.sflag [#allocation3], 1
    %13 = vsyncpa %s12, 0
    loop: start=0, step=1, limit=4
    $region2: #{tpu_custom_call.1} parent=1 // loop_pre_header
      _
    $region3: #{tpu_custom_call.1} parent=1 // loop_header
      %s15 = sphi 0, %s19
      %p16 = scmp.ge.s32.totalorder %s15, 4
      %s25 = sphi 0, %s27
      %s28 = sphi 0, %s25
      %s29 = sphi 0, %s28
      %s45 = sphi 0, %s29
      %s49 = sphi 0, %s49
      %s51 = sphi 0, %s49
      %s52 = sphi 0, %s51
      %s66 = sphi 0, %s52
      %s70 = sphi 0, %s70
      %s72 = sphi 0, %s70
      %s73 = sphi 0, %s72
      %s87 = sphi 0, %s73
      %s91 = sphi 0, %s91
      %s93 = sphi 0, %s91
      %s94 = sphi 0, %s93
      %s108 = sphi 0, %s94
      %s112 = sphi 0, %s112
      %s114 = sphi 0, %s112
      %s115 = sphi 0, %s114
      %s129 = sphi 0, %s115
      %s133 = sphi 0, %s133
      %s135 = sphi 0, %s133
      %s136 = sphi 0, %s135
      %s150 = sphi 0, %s136
      %s156 = sphi 0, %s158
      %s159 = sphi 0, %s156
      %s160 = sphi 0, %s159
      %s176 = sphi 0, %s160
    $region4: #{tpu_custom_call.1} parent=1 // loop_header_branch
      %18 = sbr.rel (%p16) target = $region8
    $region5: #{tpu_custom_call.1} parent=1 // loop_body
      %s20 = ssub.s32 %s15, 1
      %s21 = ssub.s32 %s15, 2
      %s22 = sadd.s32 %s15, 1
      %s23 = ssub.s32 %s15, %s22
      %p24 = scmp.eq.s32.totalorder %s23, 0
      %s26 = sadd.s32 %s25, 1
      %s27 = scalar_select %p24, %s25, %s26
      %p30 = pneg %p24
      %p31 = scmp.eq.s32.totalorder %s15, 1
      %p32 = por %p30, %p31
      %p33 = scmp.ne.s32.totalorder %s25, %s28
      %p34 = scmp.eq.s32.totalorder %s15, 0
      %p35 = por %p33, %p34
      %p36 = scmp.ne.s32.totalorder %s25, %s28
      %p37 = scmp.eq.s32.totalorder %s20, 1
      %p38 = por %p36, %p37
      %p39 = scmp.ne.s32.totalorder %s28, %s29
      %p40 = scmp.eq.s32.totalorder %s20, 0
      %p41 = por %p39, %p40
      %p42 = scmp.ne.s32.totalorder %s28, %s29
      %p43 = scmp.eq.s32.totalorder %s21, 1
      %p44 = por %p42, %p43
      %p46 = scmp.ne.s32.totalorder %s29, %s45
      %p47 = scmp.eq.s32.totalorder %s21, 0
      %p48 = por %p46, %p47
      %s50 = sadd.s32 %s49, 1
      %p53 = scmp.eq.s32.totalorder %s15, 1
      %p54 = scmp.ne.s32.totalorder %s49, %s51
      %p55 = scmp.eq.s32.totalorder %s15, 0
      %p56 = por %p54, %p55
      %p57 = scmp.ne.s32.totalorder %s49, %s51
      %p58 = scmp.eq.s32.totalorder %s20, 1
      %p59 = por %p57, %p58
      %p60 = scmp.ne.s32.totalorder %s51, %s52
      %p61 = scmp.eq.s32.totalorder %s20, 0
      %p62 = por %p60, %p61
      %p63 = scmp.ne.s32.totalorder %s51, %s52
      %p64 = scmp.eq.s32.totalorder %s21, 1
      %p65 = por %p63, %p64
      %p67 = scmp.ne.s32.totalorder %s52, %s66
      %p68 = scmp.eq.s32.totalorder %s21, 0
      %p69 = por %p67, %p68
      %s71 = sadd.s32 %s70, 1
      %p74 = scmp.eq.s32.totalorder %s15, 1
      %p75 = scmp.ne.s32.totalorder %s70, %s72
      %p76 = scmp.eq.s32.totalorder %s15, 0
      %p77 = por %p75, %p76
      %p78 = scmp.ne.s32.totalorder %s70, %s72
      %p79 = scmp.eq.s32.totalorder %s20, 1
      %p80 = por %p78, %p79
      %p81 = scmp.ne.s32.totalorder %s72, %s73
      %p82 = scmp.eq.s32.totalorder %s20, 0
      %p83 = por %p81, %p82
      %p84 = scmp.ne.s32.totalorder %s72, %s73
      %p85 = scmp.eq.s32.totalorder %s21, 1
      %p86 = por %p84, %p85
      %p88 = scmp.ne.s32.totalorder %s73, %s87
      %p89 = scmp.eq.s32.totalorder %s21, 0
      %p90 = por %p88, %p89
      %s92 = sadd.s32 %s91, 1
      %p95 = scmp.eq.s32.totalorder %s15, 1
      %p96 = scmp.ne.s32.totalorder %s91, %s93
      %p97 = scmp.eq.s32.totalorder %s15, 0
      %p98 = por %p96, %p97
      %p99 = scmp.ne.s32.totalorder %s91, %s93
      %p100 = scmp.eq.s32.totalorder %s20, 1
      %p101 = por %p99, %p100
      %p102 = scmp.ne.s32.totalorder %s93, %s94
      %p103 = scmp.eq.s32.totalorder %s20, 0
      %p104 = por %p102, %p103
      %p105 = scmp.ne.s32.totalorder %s93, %s94
      %p106 = scmp.eq.s32.totalorder %s21, 1
      %p107 = por %p105, %p106
      %p109 = scmp.ne.s32.totalorder %s94, %s108
      %p110 = scmp.eq.s32.totalorder %s21, 0
      %p111 = por %p109, %p110
      %s113 = sadd.s32 %s112, 1
      %p116 = scmp.eq.s32.totalorder %s15, 1
      %p117 = scmp.ne.s32.totalorder %s112, %s114
      %p118 = scmp.eq.s32.totalorder %s15, 0
      %p119 = por %p117, %p118
      %p120 = scmp.ne.s32.totalorder %s112, %s114
      %p121 = scmp.eq.s32.totalorder %s20, 1
      %p122 = por %p120, %p121
      %p123 = scmp.ne.s32.totalorder %s114, %s115
      %p124 = scmp.eq.s32.totalorder %s20, 0
      %p125 = por %p123, %p124
      %p126 = scmp.ne.s32.totalorder %s114, %s115
      %p127 = scmp.eq.s32.totalorder %s21, 1
      %p128 = por %p126, %p127
      %p130 = scmp.ne.s32.totalorder %s115, %s129
      %p131 = scmp.eq.s32.totalorder %s21, 0
      %p132 = por %p130, %p131
      %s134 = sadd.s32 %s133, 1
      %p137 = scmp.eq.s32.totalorder %s15, 1
      %p138 = scmp.ne.s32.totalorder %s133, %s135
      %p139 = scmp.eq.s32.totalorder %s15, 0
      %p140 = por %p138, %p139
      %p141 = scmp.ne.s32.totalorder %s133, %s135
      %p142 = scmp.eq.s32.totalorder %s20, 1
      %p143 = por %p141, %p142
      %p144 = scmp.ne.s32.totalorder %s135, %s136
      %p145 = scmp.eq.s32.totalorder %s20, 0
      %p146 = por %p144, %p145
      %p147 = scmp.ne.s32.totalorder %s135, %s136
      %p148 = scmp.eq.s32.totalorder %s21, 1
      %p149 = por %p147, %p148
      %p151 = scmp.ne.s32.totalorder %s136, %s150
      %p152 = scmp.eq.s32.totalorder %s21, 0
      %p153 = por %p151, %p152
      %s154 = ssub.s32 %s15, %s22
      %p155 = scmp.eq.s32.totalorder %s154, 0
      %s157 = sadd.s32 %s156, 1
      %s158 = scalar_select %p155, %s156, %s157
      %p161 = pneg %p155
      %p162 = scmp.eq.s32.totalorder %s15, 1
      %p163 = por %p161, %p162
      %p164 = scmp.ne.s32.totalorder %s156, %s159
      %p165 = scmp.eq.s32.totalorder %s15, 0
      %p166 = por %p164, %p165
      %p167 = scmp.ne.s32.totalorder %s156, %s159
      %p168 = scmp.eq.s32.totalorder %s20, 1
      %p169 = por %p167, %p168
      %p170 = scmp.ne.s32.totalorder %s159, %s160
      %p171 = scmp.eq.s32.totalorder %s20, 0
      %p172 = por %p170, %p171
      %p173 = scmp.ne.s32.totalorder %s159, %s160
      %p174 = scmp.eq.s32.totalorder %s21, 1
      %p175 = por %p173, %p174
      %p177 = scmp.ne.s32.totalorder %s160, %s176
      %p178 = scmp.eq.s32.totalorder %s21, 0
      %p179 = por %p177, %p178
      %p180 = scmp.le.s32.totalorder 1, %s15
      %p181 = scmp.lt.s32.totalorder %s15, 3
      %p182 = pnand %p180, %p181
      %p183 = pneg %p182
      // Predicated region
      $region9: #{tpu_custom_call.1} parent=5 // pred_check
        _
      $region10: #{tpu_custom_call.1} parent=5 // pred_check_branch
        %185 = sbr.rel (%p182) target = $region12
      $region11: #{tpu_custom_call.1} parent=5 // pred_region
        %s186 = ssub.s32 %s15, 1
        // Predicated region
        $region13: #{tpu_custom_call.1} parent=11 // pred_check
          %p187 = pneg %p62
        $region14: #{tpu_custom_call.1} parent=11 // pred_check_branch
          %189 = sbr.rel (%p187) target = $region16
        $region15: #{tpu_custom_call.1} parent=11 // pred_region
          _
        $region16: #{tpu_custom_call.1} parent=11 // pred_fallthru
          _
        // Predicated region
        $region17: #{tpu_custom_call.1} parent=11 // pred_check
          %p190 = pneg %p83
        $region18: #{tpu_custom_call.1} parent=11 // pred_check_branch
          %192 = sbr.rel (%p190) target = $region20
        $region19: #{tpu_custom_call.1} parent=11 // pred_region
          _
        $region20: #{tpu_custom_call.1} parent=11 // pred_fallthru
          _
        // Predicated region
        $region21: #{tpu_custom_call.1} parent=11 // pred_check
          %p193 = pneg %p104
        $region22: #{tpu_custom_call.1} parent=11 // pred_check_branch
          %195 = sbr.rel (%p193) target = $region24
        $region23: #{tpu_custom_call.1} parent=11 // pred_region
          _
        $region24: #{tpu_custom_call.1} parent=11 // pred_fallthru
          _
        // Predicated region
        $region25: #{tpu_custom_call.1} parent=11 // pred_check
          %p196 = pneg %p125
        $region26: #{tpu_custom_call.1} parent=11 // pred_check_branch
          %198 = sbr.rel (%p196) target = $region28
        $region27: #{tpu_custom_call.1} parent=11 // pred_region
          _
        $region28: #{tpu_custom_call.1} parent=11 // pred_fallthru
          _
        // Predicated region
        $region29: #{tpu_custom_call.1} parent=11 // pred_check
          %p199 = pneg %p146
        $region30: #{tpu_custom_call.1} parent=11 // pred_check_branch
          %201 = sbr.rel (%p199) target = $region32
        $region31: #{tpu_custom_call.1} parent=11 // pred_region
          _
        $region32: #{tpu_custom_call.1} parent=11 // pred_fallthru
          _
      $region12: #{tpu_custom_call.1} parent=5 // pred_fallthru
        _
      %p202 = scmp.lt.s32.totalorder %s15, 2
      // Predicated region
      $region33: #{tpu_custom_call.1} parent=5 // pred_check
        %p203 = pneg %p202
      $region34: #{tpu_custom_call.1} parent=5 // pred_check_branch
        %205 = sbr.rel (%p203) target = $region36
      $region35: #{tpu_custom_call.1} parent=5 // pred_region
        // Predicated region
        $region37: #{tpu_custom_call.1} parent=35 // pred_check
          %p206 = pneg %p35
        $region38: #{tpu_custom_call.1} parent=35 // pred_check_branch
          %208 = sbr.rel (%p206) target = $region40
        $region39: #{tpu_custom_call.1} parent=35 // pred_region
          %p209 = scmp.lt.s32.totalorder %s15, 1
          %s210 = scalar_select %p209, %s15, 1
          %s211 = smul.addr %s210, 8
          %s212 = scalar_lea.vmem %s0, %s211
        $region40: #{tpu_custom_call.1} parent=35 // pred_fallthru
          _
      $region36: #{tpu_custom_call.1} parent=5 // pred_fallthru
        _
      %p213 = scmp.le.s32.totalorder 1, %s15
      %p214 = scmp.lt.s32.totalorder %s15, 3
      %p215 = pnand %p213, %p214
      %p216 = pneg %p215
      // Predicated region
      $region41: #{tpu_custom_call.1} parent=5 // pred_check
        _
      $region42: #{tpu_custom_call.1} parent=5 // pred_check_branch
        %218 = sbr.rel (%p215) target = $region44
      $region43: #{tpu_custom_call.1} parent=5 // pred_region
        %s219 = ssub.s32 %s15, 1
        %p220 = scmp.lt.s32.totalorder %s20, 1
        %s221 = scalar_select %p220, %s20, 1
        %s222 = smul.addr %s221, 8
        %s223 = scalar_lea.vmem %s0, %s222
        %p224 = pneg %p41
        %p225 = pneg %p38
        %p226 = pneg %p62
        %p227 = pneg %p59
        %p228 = pneg %p83
        %p229 = pneg %p80
        %p230 = pneg %p104
        %p231 = pneg %p101
        %p232 = pneg %p125
        %p233 = pneg %p122
        %p234 = pneg %p146
        %p235 = pneg %p143
        %p236 = pneg %p172
        %p237 = pneg %p169
        %s238 = sand.u32 %s159, 1
        %s239 = scalar_lea.sflag [#allocation3], %s238
        %s240 = sand.u32 %s159, 1
        %s241 = smul.addr %s240, 8
        %s242 = scalar_lea.vmem [#allocation2], %s241
        %p243 = scmp.lt.s32.totalorder %s20, 1
        %s244 = scalar_select %p243, %s20, 1
        %s245 = smul.addr %s244, 8
        %s246 = scalar_lea.vmem %s0, %s245
        %v247 = vld [vmem:[%s246] sm:$0xff]
        %v248 = vld [vmem:[%s1] sm:$0xff]
        %v249 = vld [vmem:[%s1 + $0x8] sm:$0xff]
        %v250 = vld [vmem:[%s1 + $0x10] sm:$0xff]
        %v251 = vld [vmem:[%s1 + $0x18] sm:$0xff]
        %v252 = vld [vmem:[%s1 + $0x20] sm:$0xff]
        %v253 = vld [vmem:[%s1 + $0x28] sm:$0xff]
        %v254 = vld [vmem:[%s1 + $0x30] sm:$0xff]
        %v255 = vld [vmem:[%s1 + $0x38] sm:$0xff]
        %v256 = vld [vmem:[%s1 + $0x40] sm:$0xff]
        %v257 = vld [vmem:[%s1 + $0x48] sm:$0xff]
        %v258 = vld [vmem:[%s1 + $0x50] sm:$0xff]
        %v259 = vld [vmem:[%s1 + $0x58] sm:$0xff]
        %v260 = vld [vmem:[%s1 + $0x60] sm:$0xff]
        %v261 = vld [vmem:[%s1 + $0x68] sm:$0xff]
        %v262 = vld [vmem:[%s1 + $0x70] sm:$0xff]
        %v263 = vld [vmem:[%s1 + $0x78] sm:$0xff]
        %v264 = vld [vmem:[%s5] sm:$0x1]
        %v265 = vlaneseq
        %v266 = vshrl.u32 %v265, 7
        %v267 = vsub.s32 0, %v266
        %v268 = vrot.slane %v264, %v267
        %269 = vmatprep.subr.mxu0 0.0
        %v270 = vand.u32 %v263, 4294901760
        %271 = vmatpush1.msra.mxu0 %v270
        %272 = vmatprep.subr.mxu0 0.0
        %v273 = vand.u32 %v262, 4294901760
        %274 = vmatpush1.msra.mxu0 %v273
        %275 = vmatprep.subr.mxu0 0.0
        %v276 = vand.u32 %v261, 4294901760
        %277 = vmatpush1.msra.mxu0 %v276
        %278 = vmatprep.subr.mxu0 0.0
        %v279 = vand.u32 %v260, 4294901760
        %280 = vmatpush1.msra.mxu0 %v279
        %281 = vmatprep.subr.mxu0 0.0
        %v282 = vand.u32 %v259, 4294901760
        %283 = vmatpush1.msra.mxu0 %v282
        %284 = vmatprep.subr.mxu0 0.0
        %v285 = vand.u32 %v258, 4294901760
        %286 = vmatpush1.msra.mxu0 %v285
        %287 = vmatprep.subr.mxu0 0.0
        %v288 = vand.u32 %v257, 4294901760
        %289 = vmatpush1.msra.mxu0 %v288
        %290 = vmatprep.subr.mxu0 0.0
        %v291 = vand.u32 %v256, 4294901760
        %292 = vmatpush1.msra.mxu0 %v291
        %293 = vmatprep.subr.mxu0 0.0
        %v294 = vand.u32 %v255, 4294901760
        %295 = vmatpush1.msra.mxu0 %v294
        %296 = vmatprep.subr.mxu0 0.0
        %v297 = vand.u32 %v254, 4294901760
        %298 = vmatpush1.msra.mxu0 %v297
        %299 = vmatprep.subr.mxu0 0.0
        %v300 = vand.u32 %v253, 4294901760
        %301 = vmatpush1.msra.mxu0 %v300
        %302 = vmatprep.subr.mxu0 0.0
        %v303 = vand.u32 %v252, 4294901760
        %304 = vmatpush1.msra.mxu0 %v303
        %305 = vmatprep.subr.mxu0 0.0
        %v306 = vand.u32 %v251, 4294901760
        %307 = vmatpush1.msra.mxu0 %v306
        %308 = vmatprep.subr.mxu0 0.0
        %v309 = vand.u32 %v250, 4294901760
        %310 = vmatpush1.msra.mxu0 %v309
        %311 = vmatprep.subr.mxu0 0.0
        %v312 = vand.u32 %v249, 4294901760
        %313 = vmatpush1.msra.mxu0 %v312
        %314 = vmatprep.subr.mxu0 0.0
        %v315 = vand.u32 %v248, 4294901760
        %316 = vmatpush1.msra.mxu0 %v315
        %317 = vmatprep.subr.mxu0 0.0
        %318 = vmatpush2.msra.mxu0 0.0
        %319 = vmatprep.subr.mxu0 0.0
        %320 = vmatpush2.msra.mxu0 0.0
        %321 = vmatprep.subr.mxu0 0.0
        %322 = vmatpush2.msra.mxu0 0.0
        %323 = vmatprep.subr.mxu0 0.0
        %324 = vmatpush2.msra.mxu0 0.0
        %325 = vmatprep.subr.mxu0 0.0
        %326 = vmatpush2.msra.mxu0 0.0
        %327 = vmatprep.subr.mxu0 0.0
        %328 = vmatpush2.msra.mxu0 0.0
        %329 = vmatprep.subr.mxu0 0.0
        %330 = vmatpush2.msra.mxu0 0.0
        %331 = vmatprep.subr.mxu0 0.0
        %332 = vmatpush2.msra.mxu0 0.0
        %333 = vmatprep.subr.mxu0 0.0
        %334 = vmatpush2.msra.mxu0 0.0
        %335 = vmatprep.subr.mxu0 0.0
        %336 = vmatpush2.msra.mxu0 0.0
        %337 = vmatprep.subr.mxu0 0.0
        %338 = vmatpush2.msra.mxu0 0.0
        %339 = vmatprep.subr.mxu0 0.0
        %340 = vmatpush2.msra.mxu0 0.0
        %341 = vmatprep.subr.mxu0 0.0
        %342 = vmatpush2.msra.mxu0 0.0
        %343 = vmatprep.subr.mxu0 0.0
        %344 = vmatpush2.msra.mxu0 0.0
        %345 = vmatprep.subr.mxu0 0.0
        %346 = vmatpush2.msra.mxu0 0.0
        %347 = vmatprep.subr.mxu0 0.0
        %348 = vmatpush2.msra.mxu0 0.0
        %349 = vmatprep.mubr.f32.mxu0 0.0
        %v350 = vand.u32 %v247, 4294901760
        %v351 = vsub.f32 %v247, %v350
        %v352 = vand.u32 %v351, 4294901760
        %v353 = vsub.f32 %v351, %v352
        %v354 = vand.u32 %v353, 4294901760
        %355 = vmatmul.mubr.f32.gmra.mxu0 %v354
        %v356 = vpop.f32.mrf.mxu0
        %v357 = vadd.f32 %v268, %v356
        %v358 = vpop.f32.mrf.mxu0
        %359 = vdwg.mxu0
        %360 = vmatprep.subr.mxu0 0.0
        %v361 = vand.u32 %v263, 4294901760
        %v362 = vsub.f32 %v263, %v361
        %v363 = vand.u32 %v362, 4294901760
        %v364 = vsub.f32 %v362, %v363
        %v365 = vand.u32 %v364, 4294901760
        %366 = vmatpush1.msra.mxu0 %v365
        %367 = vmatprep.subr.mxu0 0.0
        %v368 = vand.u32 %v262, 4294901760
        %v369 = vsub.f32 %v262, %v368
        %v370 = vand.u32 %v369, 4294901760
        %v371 = vsub.f32 %v369, %v370
        %v372 = vand.u32 %v371, 4294901760
        %373 = vmatpush1.msra.mxu0 %v372
        %374 = vmatprep.subr.mxu0 0.0
        %v375 = vand.u32 %v261, 4294901760
        %v376 = vsub.f32 %v261, %v375
        %v377 = vand.u32 %v376, 4294901760
        %v378 = vsub.f32 %v376, %v377
        %v379 = vand.u32 %v378, 4294901760
        %380 = vmatpush1.msra.mxu0 %v379
        %381 = vmatprep.subr.mxu0 0.0
        %v382 = vand.u32 %v260, 4294901760
        %v383 = vsub.f32 %v260, %v382
        %v384 = vand.u32 %v383, 4294901760
        %v385 = vsub.f32 %v383, %v384
        %v386 = vand.u32 %v385, 4294901760
        %387 = vmatpush1.msra.mxu0 %v386
        %388 = vmatprep.subr.mxu0 0.0
        %v389 = vand.u32 %v259, 4294901760
        %v390 = vsub.f32 %v259, %v389
        %v391 = vand.u32 %v390, 4294901760
        %v392 = vsub.f32 %v390, %v391
        %v393 = vand.u32 %v392, 4294901760
        %394 = vmatpush1.msra.mxu0 %v393
        %395 = vmatprep.subr.mxu0 0.0
        %v396 = vand.u32 %v258, 4294901760
        %v397 = vsub.f32 %v258, %v396
        %v398 = vand.u32 %v397, 4294901760
        %v399 = vsub.f32 %v397, %v398
        %v400 = vand.u32 %v399, 4294901760
        %401 = vmatpush1.msra.mxu0 %v400
        %402 = vmatprep.subr.mxu0 0.0
        %v403 = vand.u32 %v257, 4294901760
        %v404 = vsub.f32 %v257, %v403
        %v405 = vand.u32 %v404, 4294901760
        %v406 = vsub.f32 %v404, %v405
        %v407 = vand.u32 %v406, 4294901760
        %408 = vmatpush1.msra.mxu0 %v407
        %409 = vmatprep.subr.mxu0 0.0
        %v410 = vand.u32 %v256, 4294901760
        %v411 = vsub.f32 %v256, %v410
        %v412 = vand.u32 %v411, 4294901760
        %v413 = vsub.f32 %v411, %v412
        %v414 = vand.u32 %v413, 4294901760
        %415 = vmatpush1.msra.mxu0 %v414
        %416 = vmatprep.subr.mxu0 0.0
        %v417 = vand.u32 %v255, 4294901760
        %v418 = vsub.f32 %v255, %v417
        %v419 = vand.u32 %v418, 4294901760
        %v420 = vsub.f32 %v418, %v419
        %v421 = vand.u32 %v420, 4294901760
        %422 = vmatpush1.msra.mxu0 %v421
        %423 = vmatprep.subr.mxu0 0.0
        %v424 = vand.u32 %v254, 4294901760
        %v425 = vsub.f32 %v254, %v424
        %v426 = vand.u32 %v425, 4294901760
        %v427 = vsub.f32 %v425, %v426
        %v428 = vand.u32 %v427, 4294901760
        %429 = vmatpush1.msra.mxu0 %v428
        %430 = vmatprep.subr.mxu0 0.0
        %v431 = vand.u32 %v253, 4294901760
        %v432 = vsub.f32 %v253, %v431
        %v433 = vand.u32 %v432, 4294901760
        %v434 = vsub.f32 %v432, %v433
        %v435 = vand.u32 %v434, 4294901760
        %436 = vmatpush1.msra.mxu0 %v435
        %437 = vmatprep.subr.mxu0 0.0
        %v438 = vand.u32 %v252, 4294901760
        %v439 = vsub.f32 %v252, %v438
        %v440 = vand.u32 %v439, 4294901760
        %v441 = vsub.f32 %v439, %v440
        %v442 = vand.u32 %v441, 4294901760
        %443 = vmatpush1.msra.mxu0 %v442
        %444 = vmatprep.subr.mxu0 0.0
        %v445 = vand.u32 %v251, 4294901760
        %v446 = vsub.f32 %v251, %v445
        %v447 = vand.u32 %v446, 4294901760
        %v448 = vsub.f32 %v446, %v447
        %v449 = vand.u32 %v448, 4294901760
        %450 = vmatpush1.msra.mxu0 %v449
        %451 = vmatprep.subr.mxu0 0.0
        %v452 = vand.u32 %v250, 4294901760
        %v453 = vsub.f32 %v250, %v452
        %v454 = vand.u32 %v453, 4294901760
        %v455 = vsub.f32 %v453, %v454
        %v456 = vand.u32 %v455, 4294901760
        %457 = vmatpush1.msra.mxu0 %v456
        %458 = vmatprep.subr.mxu0 0.0
        %v459 = vand.u32 %v249, 4294901760
        %v460 = vsub.f32 %v249, %v459
        %v461 = vand.u32 %v460, 4294901760
        %v462 = vsub.f32 %v460, %v461
        %v463 = vand.u32 %v462, 4294901760
        %464 = vmatpush1.msra.mxu0 %v463
        %465 = vmatprep.subr.mxu0 0.0
        %v466 = vand.u32 %v248, 4294901760
        %v467 = vsub.f32 %v248, %v466
        %v468 = vand.u32 %v467, 4294901760
        %v469 = vsub.f32 %v467, %v468
        %v470 = vand.u32 %v469, 4294901760
        %471 = vmatpush1.msra.mxu0 %v470
        %472 = vmatprep.subr.mxu0 0.0
        %473 = vmatpush2.msra.mxu0 0.0
        %474 = vmatprep.subr.mxu0 0.0
        %475 = vmatpush2.msra.mxu0 0.0
        %476 = vmatprep.subr.mxu0 0.0
        %477 = vmatpush2.msra.mxu0 0.0
        %478 = vmatprep.subr.mxu0 0.0
        %479 = vmatpush2.msra.mxu0 0.0
        %480 = vmatprep.subr.mxu0 0.0
        %481 = vmatpush2.msra.mxu0 0.0
        %482 = vmatprep.subr.mxu0 0.0
        %483 = vmatpush2.msra.mxu0 0.0
        %484 = vmatprep.subr.mxu0 0.0
        %485 = vmatpush2.msra.mxu0 0.0
        %486 = vmatprep.subr.mxu0 0.0
        %487 = vmatpush2.msra.mxu0 0.0
        %488 = vmatprep.subr.mxu0 0.0
        %489 = vmatpush2.msra.mxu0 0.0
        %490 = vmatprep.subr.mxu0 0.0
        %491 = vmatpush2.msra.mxu0 0.0
        %492 = vmatprep.subr.mxu0 0.0
        %493 = vmatpush2.msra.mxu0 0.0
        %494 = vmatprep.subr.mxu0 0.0
        %495 = vmatpush2.msra.mxu0 0.0
        %496 = vmatprep.subr.mxu0 0.0
        %497 = vmatpush2.msra.mxu0 0.0
        %498 = vmatprep.subr.mxu0 0.0
        %499 = vmatpush2.msra.mxu0 0.0
        %500 = vmatprep.subr.mxu0 0.0
        %501 = vmatpush2.msra.mxu0 0.0
        %502 = vmatprep.subr.mxu0 0.0
        %503 = vmatpush2.msra.mxu0 0.0
        %504 = vmatprep.mubr.f32.mxu0 0.0
        %v505 = vand.u32 %v247, 4294901760
        %506 = vmatmul.mubr.f32.gmra.mxu0 %v505
        %v507 = vpop.f32.mrf.mxu0
        %v508 = vadd.f32 %v357, %v507
        %v509 = vpop.f32.mrf.mxu0
        %510 = vdwg.mxu0
        %511 = vmatprep.subr.mxu0 0.0
        %v512 = vand.u32 %v263, 4294901760
        %v513 = vsub.f32 %v263, %v512
        %514 = vmatpush1.msra.mxu0 %v513
        %515 = vmatprep.subr.mxu0 0.0
        %v516 = vand.u32 %v262, 4294901760
        %v517 = vsub.f32 %v262, %v516
        %518 = vmatpush1.msra.mxu0 %v517
        %519 = vmatprep.subr.mxu0 0.0
        %v520 = vand.u32 %v261, 4294901760
        %v521 = vsub.f32 %v261, %v520
        %522 = vmatpush1.msra.mxu0 %v521
        %523 = vmatprep.subr.mxu0 0.0
        %v524 = vand.u32 %v260, 4294901760
        %v525 = vsub.f32 %v260, %v524
        %526 = vmatpush1.msra.mxu0 %v525
        %527 = vmatprep.subr.mxu0 0.0
        %v528 = vand.u32 %v259, 4294901760
        %v529 = vsub.f32 %v259, %v528
        %530 = vmatpush1.msra.mxu0 %v529
        %531 = vmatprep.subr.mxu0 0.0
        %v532 = vand.u32 %v258, 4294901760
        %v533 = vsub.f32 %v258, %v532
        %534 = vmatpush1.msra.mxu0 %v533
        %535 = vmatprep.subr.mxu0 0.0
        %v536 = vand.u32 %v257, 4294901760
        %v537 = vsub.f32 %v257, %v536
        %538 = vmatpush1.msra.mxu0 %v537
        %539 = vmatprep.subr.mxu0 0.0
        %v540 = vand.u32 %v256, 4294901760
        %v541 = vsub.f32 %v256, %v540
        %542 = vmatpush1.msra.mxu0 %v541
        %543 = vmatprep.subr.mxu0 0.0
        %v544 = vand.u32 %v255, 4294901760
        %v545 = vsub.f32 %v255, %v544
        %546 = vmatpush1.msra.mxu0 %v545
        %547 = vmatprep.subr.mxu0 0.0
        %v548 = vand.u32 %v254, 4294901760
        %v549 = vsub.f32 %v254, %v548
        %550 = vmatpush1.msra.mxu0 %v549
        %551 = vmatprep.subr.mxu0 0.0
        %v552 = vand.u32 %v253, 4294901760
        %v553 = vsub.f32 %v253, %v552
        %554 = vmatpush1.msra.mxu0 %v553
        %555 = vmatprep.subr.mxu0 0.0
        %v556 = vand.u32 %v252, 4294901760
        %v557 = vsub.f32 %v252, %v556
        %558 = vmatpush1.msra.mxu0 %v557
        %559 = vmatprep.subr.mxu0 0.0
        %v560 = vand.u32 %v251, 4294901760
        %v561 = vsub.f32 %v251, %v560
        %562 = vmatpush1.msra.mxu0 %v561
        %563 = vmatprep.subr.mxu0 0.0
        %v564 = vand.u32 %v250, 4294901760
        %v565 = vsub.f32 %v250, %v564
        %566 = vmatpush1.msra.mxu0 %v565
        %567 = vmatprep.subr.mxu0 0.0
        %v568 = vand.u32 %v249, 4294901760
        %v569 = vsub.f32 %v249, %v568
        %570 = vmatpush1.msra.mxu0 %v569
        %571 = vmatprep.subr.mxu0 0.0
        %v572 = vand.u32 %v248, 4294901760
        %v573 = vsub.f32 %v248, %v572
        %574 = vmatpush1.msra.mxu0 %v573
        %575 = vmatprep.subr.mxu0 0.0
        %576 = vmatpush2.msra.mxu0 0.0
        %577 = vmatprep.subr.mxu0 0.0
        %578 = vmatpush2.msra.mxu0 0.0
        %579 = vmatprep.subr.mxu0 0.0
        %580 = vmatpush2.msra.mxu0 0.0
        %581 = vmatprep.subr.mxu0 0.0
        %582 = vmatpush2.msra.mxu0 0.0
        %583 = vmatprep.subr.mxu0 0.0
        %584 = vmatpush2.msra.mxu0 0.0
        %585 = vmatprep.subr.mxu0 0.0
        %586 = vmatpush2.msra.mxu0 0.0
        %587 = vmatprep.subr.mxu0 0.0
        %588 = vmatpush2.msra.mxu0 0.0
        %589 = vmatprep.subr.mxu0 0.0
        %590 = vmatpush2.msra.mxu0 0.0
        %591 = vmatprep.subr.mxu0 0.0
        %592 = vmatpush2.msra.mxu0 0.0
        %593 = vmatprep.subr.mxu0 0.0
        %594 = vmatpush2.msra.mxu0 0.0
        %595 = vmatprep.subr.mxu0 0.0
        %596 = vmatpush2.msra.mxu0 0.0
        %597 = vmatprep.subr.mxu0 0.0
        %598 = vmatpush2.msra.mxu0 0.0
        %599 = vmatprep.subr.mxu0 0.0
        %600 = vmatpush2.msra.mxu0 0.0
        %601 = vmatprep.subr.mxu0 0.0
        %602 = vmatpush2.msra.mxu0 0.0
        %603 = vmatprep.subr.mxu0 0.0
        %604 = vmatpush2.msra.mxu0 0.0
        %605 = vmatprep.subr.mxu0 0.0
        %606 = vmatpush2.msra.mxu0 0.0
        %607 = vmatprep.mubr.f32.mxu0 0.0
        %v608 = vand.u32 %v247, 4294901760
        %v609 = vsub.f32 %v247, %v608
        %610 = vmatmul.mubr.f32.gmra.mxu0 %v609
        %v611 = vpop.f32.mrf.mxu0
        %v612 = vadd.f32 %v508, %v611
        %v613 = vpop.f32.mrf.mxu0
        %614 = vdwg.mxu0
        %615 = vmatprep.subr.mxu0 0.0
        %v616 = vand.u32 %v263, 4294901760
        %617 = vmatpush1.msra.mxu0 %v616
        %618 = vmatprep.subr.mxu0 0.0
        %v619 = vand.u32 %v262, 4294901760
        %620 = vmatpush1.msra.mxu0 %v619
        %621 = vmatprep.subr.mxu0 0.0
        %v622 = vand.u32 %v261, 4294901760
        %623 = vmatpush1.msra.mxu0 %v622
        %624 = vmatprep.subr.mxu0 0.0
        %v625 = vand.u32 %v260, 4294901760
        %626 = vmatpush1.msra.mxu0 %v625
        %627 = vmatprep.subr.mxu0 0.0
        %v628 = vand.u32 %v259, 4294901760
        %629 = vmatpush1.msra.mxu0 %v628
        %630 = vmatprep.subr.mxu0 0.0
        %v631 = vand.u32 %v258, 4294901760
        %632 = vmatpush1.msra.mxu0 %v631
        %633 = vmatprep.subr.mxu0 0.0
        %v634 = vand.u32 %v257, 4294901760
        %635 = vmatpush1.msra.mxu0 %v634
        %636 = vmatprep.subr.mxu0 0.0
        %v637 = vand.u32 %v256, 4294901760
        %638 = vmatpush1.msra.mxu0 %v637
        %639 = vmatprep.subr.mxu0 0.0
        %v640 = vand.u32 %v255, 4294901760
        %641 = vmatpush1.msra.mxu0 %v640
        %642 = vmatprep.subr.mxu0 0.0
        %v643 = vand.u32 %v254, 4294901760
        %644 = vmatpush1.msra.mxu0 %v643
        %645 = vmatprep.subr.mxu0 0.0
        %v646 = vand.u32 %v253, 4294901760
        %647 = vmatpush1.msra.mxu0 %v646
        %648 = vmatprep.subr.mxu0 0.0
        %v649 = vand.u32 %v252, 4294901760
        %650 = vmatpush1.msra.mxu0 %v649
        %651 = vmatprep.subr.mxu0 0.0
        %v652 = vand.u32 %v251, 4294901760
        %653 = vmatpush1.msra.mxu0 %v652
        %654 = vmatprep.subr.mxu0 0.0
        %v655 = vand.u32 %v250, 4294901760
        %656 = vmatpush1.msra.mxu0 %v655
        %657 = vmatprep.subr.mxu0 0.0
        %v658 = vand.u32 %v249, 4294901760
        %659 = vmatpush1.msra.mxu0 %v658
        %660 = vmatprep.subr.mxu0 0.0
        %v661 = vand.u32 %v248, 4294901760
        %662 = vmatpush1.msra.mxu0 %v661
        %663 = vmatprep.subr.mxu0 0.0
        %664 = vmatpush2.msra.mxu0 0.0
        %665 = vmatprep.subr.mxu0 0.0
        %666 = vmatpush2.msra.mxu0 0.0
        %667 = vmatprep.subr.mxu0 0.0
        %668 = vmatpush2.msra.mxu0 0.0
        %669 = vmatprep.subr.mxu0 0.0
        %670 = vmatpush2.msra.mxu0 0.0
        %671 = vmatprep.subr.mxu0 0.0
        %672 = vmatpush2.msra.mxu0 0.0
        %673 = vmatprep.subr.mxu0 0.0
        %674 = vmatpush2.msra.mxu0 0.0
        %675 = vmatprep.subr.mxu0 0.0
        %676 = vmatpush2.msra.mxu0 0.0
        %677 = vmatprep.subr.mxu0 0.0
        %678 = vmatpush2.msra.mxu0 0.0
        %679 = vmatprep.subr.mxu0 0.0
        %680 = vmatpush2.msra.mxu0 0.0
        %681 = vmatprep.subr.mxu0 0.0
        %682 = vmatpush2.msra.mxu0 0.0
        %683 = vmatprep.subr.mxu0 0.0
        %684 = vmatpush2.msra.mxu0 0.0
        %685 = vmatprep.subr.mxu0 0.0
        %686 = vmatpush2.msra.mxu0 0.0
        %687 = vmatprep.subr.mxu0 0.0
        %688 = vmatpush2.msra.mxu0 0.0
        %689 = vmatprep.subr.mxu0 0.0
        %690 = vmatpush2.msra.mxu0 0.0
        %691 = vmatprep.subr.mxu0 0.0
        %692 = vmatpush2.msra.mxu0 0.0
        %693 = vmatprep.subr.mxu0 0.0
        %694 = vmatpush2.msra.mxu0 0.0
        %695 = vmatprep.mubr.f32.mxu0 0.0
        %v696 = vand.u32 %v247, 4294901760
        %v697 = vsub.f32 %v247, %v696
        %v698 = vand.u32 %v697, 4294901760
        %699 = vmatmul.mubr.f32.gmra.mxu0 %v698
        %v700 = vpop.f32.mrf.mxu0
        %v701 = vadd.f32 %v612, %v700
        %v702 = vpop.f32.mrf.mxu0
        %703 = vdwg.mxu0
        %704 = vmatprep.subr.mxu0 0.0
        %v705 = vand.u32 %v263, 4294901760
        %v706 = vsub.f32 %v263, %v705
        %v707 = vand.u32 %v706, 4294901760
        %708 = vmatpush1.msra.mxu0 %v707
        %709 = vmatprep.subr.mxu0 0.0
        %v710 = vand.u32 %v262, 4294901760
        %v711 = vsub.f32 %v262, %v710
        %v712 = vand.u32 %v711, 4294901760
        %713 = vmatpush1.msra.mxu0 %v712
        %714 = vmatprep.subr.mxu0 0.0
        %v715 = vand.u32 %v261, 4294901760
        %v716 = vsub.f32 %v261, %v715
        %v717 = vand.u32 %v716, 4294901760
        %718 = vmatpush1.msra.mxu0 %v717
        %719 = vmatprep.subr.mxu0 0.0
        %v720 = vand.u32 %v260, 4294901760
        %v721 = vsub.f32 %v260, %v720
        %v722 = vand.u32 %v721, 4294901760
        %723 = vmatpush1.msra.mxu0 %v722
        %724 = vmatprep.subr.mxu0 0.0
        %v725 = vand.u32 %v259, 4294901760
        %v726 = vsub.f32 %v259, %v725
        %v727 = vand.u32 %v726, 4294901760
        %728 = vmatpush1.msra.mxu0 %v727
        %729 = vmatprep.subr.mxu0 0.0
        %v730 = vand.u32 %v258, 4294901760
        %v731 = vsub.f32 %v258, %v730
        %v732 = vand.u32 %v731, 4294901760
        %733 = vmatpush1.msra.mxu0 %v732
        %734 = vmatprep.subr.mxu0 0.0
        %v735 = vand.u32 %v257, 4294901760
        %v736 = vsub.f32 %v257, %v735
        %v737 = vand.u32 %v736, 4294901760
        %738 = vmatpush1.msra.mxu0 %v737
        %739 = vmatprep.subr.mxu0 0.0
        %v740 = vand.u32 %v256, 4294901760
        %v741 = vsub.f32 %v256, %v740
        %v742 = vand.u32 %v741, 4294901760
        %743 = vmatpush1.msra.mxu0 %v742
        %744 = vmatprep.subr.mxu0 0.0
        %v745 = vand.u32 %v255, 4294901760
        %v746 = vsub.f32 %v255, %v745
        %v747 = vand.u32 %v746, 4294901760
        %748 = vmatpush1.msra.mxu0 %v747
        %749 = vmatprep.subr.mxu0 0.0
        %v750 = vand.u32 %v254, 4294901760
        %v751 = vsub.f32 %v254, %v750
        %v752 = vand.u32 %v751, 4294901760
        %753 = vmatpush1.msra.mxu0 %v752
        %754 = vmatprep.subr.mxu0 0.0
        %v755 = vand.u32 %v253, 4294901760
        %v756 = vsub.f32 %v253, %v755
        %v757 = vand.u32 %v756, 4294901760
        %758 = vmatpush1.msra.mxu0 %v757
        %759 = vmatprep.subr.mxu0 0.0
        %v760 = vand.u32 %v252, 4294901760
        %v761 = vsub.f32 %v252, %v760
        %v762 = vand.u32 %v761, 4294901760
        %763 = vmatpush1.msra.mxu0 %v762
        %764 = vmatprep.subr.mxu0 0.0
        %v765 = vand.u32 %v251, 4294901760
        %v766 = vsub.f32 %v251, %v765
        %v767 = vand.u32 %v766, 4294901760
        %768 = vmatpush1.msra.mxu0 %v767
        %769 = vmatprep.subr.mxu0 0.0
        %v770 = vand.u32 %v250, 4294901760
        %v771 = vsub.f32 %v250, %v770
        %v772 = vand.u32 %v771, 4294901760
        %773 = vmatpush1.msra.mxu0 %v772
        %774 = vmatprep.subr.mxu0 0.0
        %v775 = vand.u32 %v249, 4294901760
        %v776 = vsub.f32 %v249, %v775
        %v777 = vand.u32 %v776, 4294901760
        %778 = vmatpush1.msra.mxu0 %v777
        %779 = vmatprep.subr.mxu0 0.0
        %v780 = vand.u32 %v248, 4294901760
        %v781 = vsub.f32 %v248, %v780
        %v782 = vand.u32 %v781, 4294901760
        %783 = vmatpush1.msra.mxu0 %v782
        %784 = vmatprep.subr.mxu0 0.0
        %785 = vmatpush2.msra.mxu0 0.0
        %786 = vmatprep.subr.mxu0 0.0
        %787 = vmatpush2.msra.mxu0 0.0
        %788 = vmatprep.subr.mxu0 0.0
        %789 = vmatpush2.msra.mxu0 0.0
        %790 = vmatprep.subr.mxu0 0.0
        %791 = vmatpush2.msra.mxu0 0.0
        %792 = vmatprep.subr.mxu0 0.0
        %793 = vmatpush2.msra.mxu0 0.0
        %794 = vmatprep.subr.mxu0 0.0
        %795 = vmatpush2.msra.mxu0 0.0
        %796 = vmatprep.subr.mxu0 0.0
        %797 = vmatpush2.msra.mxu0 0.0
        %798 = vmatprep.subr.mxu0 0.0
        %799 = vmatpush2.msra.mxu0 0.0
        %800 = vmatprep.subr.mxu0 0.0
        %801 = vmatpush2.msra.mxu0 0.0
        %802 = vmatprep.subr.mxu0 0.0
        %803 = vmatpush2.msra.mxu0 0.0
        %804 = vmatprep.subr.mxu0 0.0
        %805 = vmatpush2.msra.mxu0 0.0
        %806 = vmatprep.subr.mxu0 0.0
        %807 = vmatpush2.msra.mxu0 0.0
        %808 = vmatprep.subr.mxu0 0.0
        %809 = vmatpush2.msra.mxu0 0.0
        %810 = vmatprep.subr.mxu0 0.0
        %811 = vmatpush2.msra.mxu0 0.0
        %812 = vmatprep.subr.mxu0 0.0
        %813 = vmatpush2.msra.mxu0 0.0
        %814 = vmatprep.subr.mxu0 0.0
        %815 = vmatpush2.msra.mxu0 0.0
        %816 = vmatprep.mubr.f32.mxu0 0.0
        %v817 = vand.u32 %v247, 4294901760
        %818 = vmatmul.mubr.f32.gmra.mxu0 %v817
        %v819 = vpop.f32.mrf.mxu0
        %v820 = vadd.f32 %v701, %v819
        %v821 = vpop.f32.mrf.mxu0
        %822 = vdwg.mxu0
        %823 = vmatprep.subr.mxu0 0.0
        %v824 = vand.u32 %v263, 4294901760
        %825 = vmatpush1.msra.mxu0 %v824
        %826 = vmatprep.subr.mxu0 0.0
        %v827 = vand.u32 %v262, 4294901760
        %828 = vmatpush1.msra.mxu0 %v827
        %829 = vmatprep.subr.mxu0 0.0
        %v830 = vand.u32 %v261, 4294901760
        %831 = vmatpush1.msra.mxu0 %v830
        %832 = vmatprep.subr.mxu0 0.0
        %v833 = vand.u32 %v260, 4294901760
        %834 = vmatpush1.msra.mxu0 %v833
        %835 = vmatprep.subr.mxu0 0.0
        %v836 = vand.u32 %v259, 4294901760
        %837 = vmatpush1.msra.mxu0 %v836
        %838 = vmatprep.subr.mxu0 0.0
        %v839 = vand.u32 %v258, 4294901760
        %840 = vmatpush1.msra.mxu0 %v839
        %841 = vmatprep.subr.mxu0 0.0
        %v842 = vand.u32 %v257, 4294901760
        %843 = vmatpush1.msra.mxu0 %v842
        %844 = vmatprep.subr.mxu0 0.0
        %v845 = vand.u32 %v256, 4294901760
        %846 = vmatpush1.msra.mxu0 %v845
        %847 = vmatprep.subr.mxu0 0.0
        %v848 = vand.u32 %v255, 4294901760
        %849 = vmatpush1.msra.mxu0 %v848
        %850 = vmatprep.subr.mxu0 0.0
        %v851 = vand.u32 %v254, 4294901760
        %852 = vmatpush1.msra.mxu0 %v851
        %853 = vmatprep.subr.mxu0 0.0
        %v854 = vand.u32 %v253, 4294901760
        %855 = vmatpush1.msra.mxu0 %v854
        %856 = vmatprep.subr.mxu0 0.0
        %v857 = vand.u32 %v252, 4294901760
        %858 = vmatpush1.msra.mxu0 %v857
        %859 = vmatprep.subr.mxu0 0.0
        %v860 = vand.u32 %v251, 4294901760
        %861 = vmatpush1.msra.mxu0 %v860
        %862 = vmatprep.subr.mxu0 0.0
        %v863 = vand.u32 %v250, 4294901760
        %864 = vmatpush1.msra.mxu0 %v863
        %865 = vmatprep.subr.mxu0 0.0
        %v866 = vand.u32 %v249, 4294901760
        %867 = vmatpush1.msra.mxu0 %v866
        %868 = vmatprep.subr.mxu0 0.0
        %v869 = vand.u32 %v248, 4294901760
        %870 = vmatpush1.msra.mxu0 %v869
        %871 = vmatprep.subr.mxu0 0.0
        %872 = vmatpush2.msra.mxu0 0.0
        %873 = vmatprep.subr.mxu0 0.0
        %874 = vmatpush2.msra.mxu0 0.0
        %875 = vmatprep.subr.mxu0 0.0
        %876 = vmatpush2.msra.mxu0 0.0
        %877 = vmatprep.subr.mxu0 0.0
        %878 = vmatpush2.msra.mxu0 0.0
        %879 = vmatprep.subr.mxu0 0.0
        %880 = vmatpush2.msra.mxu0 0.0
        %881 = vmatprep.subr.mxu0 0.0
        %882 = vmatpush2.msra.mxu0 0.0
        %883 = vmatprep.subr.mxu0 0.0
        %884 = vmatpush2.msra.mxu0 0.0
        %885 = vmatprep.subr.mxu0 0.0
        %886 = vmatpush2.msra.mxu0 0.0
        %887 = vmatprep.subr.mxu0 0.0
        %888 = vmatpush2.msra.mxu0 0.0
        %889 = vmatprep.subr.mxu0 0.0
        %890 = vmatpush2.msra.mxu0 0.0
        %891 = vmatprep.subr.mxu0 0.0
        %892 = vmatpush2.msra.mxu0 0.0
        %893 = vmatprep.subr.mxu0 0.0
        %894 = vmatpush2.msra.mxu0 0.0
        %895 = vmatprep.subr.mxu0 0.0
        %896 = vmatpush2.msra.mxu0 0.0
        %897 = vmatprep.subr.mxu0 0.0
        %898 = vmatpush2.msra.mxu0 0.0
        %899 = vmatprep.subr.mxu0 0.0
        %900 = vmatpush2.msra.mxu0 0.0
        %901 = vmatprep.subr.mxu0 0.0
        %902 = vmatpush2.msra.mxu0 0.0
        %903 = vmatprep.mubr.f32.mxu0 0.0
        %v904 = vand.u32 %v247, 4294901760
        %905 = vmatmul.mubr.f32.gmra.mxu0 %v904
        %v906 = vpop.f32.mrf.mxu0
        %v907 = vadd.f32 %v820, %v906
        %v908 = vpop.f32.mrf.mxu0
        %909 = vdwg.mxu0
        %v910 = vmul.f32 %v907, 0.5
        %v911 = vtanh.pop %v910
        %v912 = vmul.f32 %v911, 0.5
        %v913 = vadd.f32 %v912, 0.5
        %v914 = vld [vmem:[%s2] sm:$0xff]
        %v915 = vld [vmem:[%s2 + $0x8] sm:$0xff]
        %v916 = vld [vmem:[%s2 + $0x10] sm:$0xff]
        %v917 = vld [vmem:[%s2 + $0x18] sm:$0xff]
        %v918 = vld [vmem:[%s5 + $0x1] sm:$0x1]
        %v919 = vlaneseq
        %v920 = vshrl.u32 %v919, 7
        %v921 = vsub.s32 0, %v920
        %v922 = vrot.slane %v918, %v921
        %vm923 = vcmask 261120
        %v925 = vsel %vm923, %v913, 0
        %927 = vmatprep.subr.mxu0 0.0
        %928 = vmatpush1.msra.mxu0 0.0
        %929 = vmatprep.subr.mxu0 0.0
        %930 = vmatpush1.msra.mxu0 0.0
        %931 = vmatprep.subr.mxu0 0.0
        %932 = vmatpush1.msra.mxu0 0.0
        %933 = vmatprep.subr.mxu0 0.0
        %934 = vmatpush1.msra.mxu0 0.0
        %935 = vmatprep.subr.mxu0 0.0
        %936 = vmatpush1.msra.mxu0 0.0
        %937 = vmatprep.subr.mxu0 0.0
        %938 = vmatpush1.msra.mxu0 0.0
        %939 = vmatprep.subr.mxu0 0.0
        %940 = vmatpush1.msra.mxu0 0.0
        %941 = vmatprep.subr.mxu0 0.0
        %942 = vmatpush1.msra.mxu0 0.0
        %943 = vmatprep.subr.mxu0 0.0
        %944 = vmatpush1.msra.mxu0 0.0
        %945 = vmatprep.subr.mxu0 0.0
        %946 = vmatpush1.msra.mxu0 0.0
        %947 = vmatprep.subr.mxu0 0.0
        %948 = vmatpush1.msra.mxu0 0.0
        %949 = vmatprep.subr.mxu0 0.0
        %950 = vmatpush1.msra.mxu0 0.0
        %951 = vmatprep.subr.mxu0 0.0
        %v952 = vand.u32 %v917, 4294901760
        %953 = vmatpush1.msra.mxu0 %v952
        %954 = vmatprep.subr.mxu0 0.0
        %v955 = vand.u32 %v916, 4294901760
        %956 = vmatpush1.msra.mxu0 %v955
        %957 = vmatprep.subr.mxu0 0.0
        %v958 = vand.u32 %v915, 4294901760
        %959 = vmatpush1.msra.mxu0 %v958
        %960 = vmatprep.subr.mxu0 0.0
        %v961 = vand.u32 %v914, 4294901760
        %962 = vmatpush1.msra.mxu0 %v961
        %963 = vmatprep.subr.mxu0 0.0
        %964 = vmatpush2.msra.mxu0 0.0
        %965 = vmatprep.subr.mxu0 0.0
        %966 = vmatpush2.msra.mxu0 0.0
        %967 = vmatprep.subr.mxu0 0.0
        %968 = vmatpush2.msra.mxu0 0.0
        %969 = vmatprep.subr.mxu0 0.0
        %970 = vmatpush2.msra.mxu0 0.0
        %971 = vmatprep.subr.mxu0 0.0
        %972 = vmatpush2.msra.mxu0 0.0
        %973 = vmatprep.subr.mxu0 0.0
        %974 = vmatpush2.msra.mxu0 0.0
        %975 = vmatprep.subr.mxu0 0.0
        %976 = vmatpush2.msra.mxu0 0.0
        %977 = vmatprep.subr.mxu0 0.0
        %978 = vmatpush2.msra.mxu0 0.0
        %979 = vmatprep.subr.mxu0 0.0
        %980 = vmatpush2.msra.mxu0 0.0
        %981 = vmatprep.subr.mxu0 0.0
        %982 = vmatpush2.msra.mxu0 0.0
        %983 = vmatprep.subr.mxu0 0.0
        %984 = vmatpush2.msra.mxu0 0.0
        %985 = vmatprep.subr.mxu0 0.0
        %986 = vmatpush2.msra.mxu0 0.0
        %987 = vmatprep.subr.mxu0 0.0
        %988 = vmatpush2.msra.mxu0 0.0
        %989 = vmatprep.subr.mxu0 0.0
        %990 = vmatpush2.msra.mxu0 0.0
        %991 = vmatprep.subr.mxu0 0.0
        %992 = vmatpush2.msra.mxu0 0.0
        %993 = vmatprep.subr.mxu0 0.0
        %994 = vmatpush2.msra.mxu0 0.0
        %995 = vmatprep.mubr.f32.mxu0 0.0
        %v996 = vand.u32 %v925, 4294901760
        %v997 = vsub.f32 %v925, %v996
        %v998 = vand.u32 %v997, 4294901760
        %v999 = vsub.f32 %v997, %v998
        %v1000 = vand.u32 %v999, 4294901760
        %1001 = vmatmul.mubr.f32.gmra.mxu0 %v1000
        %v1002 = vpop.f32.mrf.mxu0
        %v1003 = vadd.f32 %v922, %v1002
        %v1004 = vpop.f32.mrf.mxu0
        %1005 = vdwg.mxu0
        %1006 = vmatprep.subr.mxu0 0.0
        %1007 = vmatpush1.msra.mxu0 0.0
        %1008 = vmatprep.subr.mxu0 0.0
        %1009 = vmatpush1.msra.mxu0 0.0
        %1010 = vmatprep.subr.mxu0 0.0
        %1011 = vmatpush1.msra.mxu0 0.0
        %1012 = vmatprep.subr.mxu0 0.0
        %1013 = vmatpush1.msra.mxu0 0.0
        %1014 = vmatprep.subr.mxu0 0.0
        %1015 = vmatpush1.msra.mxu0 0.0
        %1016 = vmatprep.subr.mxu0 0.0
        %1017 = vmatpush1.msra.mxu0 0.0
        %1018 = vmatprep.subr.mxu0 0.0
        %1019 = vmatpush1.msra.mxu0 0.0
        %1020 = vmatprep.subr.mxu0 0.0
        %1021 = vmatpush1.msra.mxu0 0.0
        %1022 = vmatprep.subr.mxu0 0.0
        %1023 = vmatpush1.msra.mxu0 0.0
        %1024 = vmatprep.subr.mxu0 0.0
        %1025 = vmatpush1.msra.mxu0 0.0
        %1026 = vmatprep.subr.mxu0 0.0
        %1027 = vmatpush1.msra.mxu0 0.0
        %1028 = vmatprep.subr.mxu0 0.0
        %1029 = vmatpush1.msra.mxu0 0.0
        %1030 = vmatprep.subr.mxu0 0.0
        %v1031 = vand.u32 %v917, 4294901760
        %v1032 = vsub.f32 %v917, %v1031
        %v1033 = vand.u32 %v1032, 4294901760
        %v1034 = vsub.f32 %v1032, %v1033
        %v1035 = vand.u32 %v1034, 4294901760
        %1036 = vmatpush1.msra.mxu0 %v1035
        %1037 = vmatprep.subr.mxu0 0.0
        %v1038 = vand.u32 %v916, 4294901760
        %v1039 = vsub.f32 %v916, %v1038
        %v1040 = vand.u32 %v1039, 4294901760
        %v1041 = vsub.f32 %v1039, %v1040
        %v1042 = vand.u32 %v1041, 4294901760
        %1043 = vmatpush1.msra.mxu0 %v1042
        %1044 = vmatprep.subr.mxu0 0.0
        %v1045 = vand.u32 %v915, 4294901760
        %v1046 = vsub.f32 %v915, %v1045
        %v1047 = vand.u32 %v1046, 4294901760
        %v1048 = vsub.f32 %v1046, %v1047
        %v1049 = vand.u32 %v1048, 4294901760
        %1050 = vmatpush1.msra.mxu0 %v1049
        %1051 = vmatprep.subr.mxu0 0.0
        %v1052 = vand.u32 %v914, 4294901760
        %v1053 = vsub.f32 %v914, %v1052
        %v1054 = vand.u32 %v1053, 4294901760
        %v1055 = vsub.f32 %v1053, %v1054
        %v1056 = vand.u32 %v1055, 4294901760
        %1057 = vmatpush1.msra.mxu0 %v1056
        %1058 = vmatprep.subr.mxu0 0.0
        %1059 = vmatpush2.msra.mxu0 0.0
        %1060 = vmatprep.subr.mxu0 0.0
        %1061 = vmatpush2.msra.mxu0 0.0
        %1062 = vmatprep.subr.mxu0 0.0
        %1063 = vmatpush2.msra.mxu0 0.0
        %1064 = vmatprep.subr.mxu0 0.0
        %1065 = vmatpush2.msra.mxu0 0.0
        %1066 = vmatprep.subr.mxu0 0.0
        %1067 = vmatpush2.msra.mxu0 0.0
        %1068 = vmatprep.subr.mxu0 0.0
        %1069 = vmatpush2.msra.mxu0 0.0
        %1070 = vmatprep.subr.mxu0 0.0
        %1071 = vmatpush2.msra.mxu0 0.0
        %1072 = vmatprep.subr.mxu0 0.0
        %1073 = vmatpush2.msra.mxu0 0.0
        %1074 = vmatprep.subr.mxu0 0.0
        %1075 = vmatpush2.msra.mxu0 0.0
        %1076 = vmatprep.subr.mxu0 0.0
        %1077 = vmatpush2.msra.mxu0 0.0
        %1078 = vmatprep.subr.mxu0 0.0
        %1079 = vmatpush2.msra.mxu0 0.0
        %1080 = vmatprep.subr.mxu0 0.0
        %1081 = vmatpush2.msra.mxu0 0.0
        %1082 = vmatprep.subr.mxu0 0.0
        %1083 = vmatpush2.msra.mxu0 0.0
        %1084 = vmatprep.subr.mxu0 0.0
        %1085 = vmatpush2.msra.mxu0 0.0
        %1086 = vmatprep.subr.mxu0 0.0
        %1087 = vmatpush2.msra.mxu0 0.0
        %1088 = vmatprep.subr.mxu0 0.0
        %1089 = vmatpush2.msra.mxu0 0.0
        %1090 = vmatprep.mubr.f32.mxu0 0.0
        %v1091 = vand.u32 %v925, 4294901760
        %1092 = vmatmul.mubr.f32.gmra.mxu0 %v1091
        %v1093 = vpop.f32.mrf.mxu0
        %v1094 = vadd.f32 %v1003, %v1093
        %v1095 = vpop.f32.mrf.mxu0
        %1096 = vdwg.mxu0
        %1097 = vmatprep.subr.mxu0 0.0
        %1098 = vmatpush1.msra.mxu0 0.0
        %1099 = vmatprep.subr.mxu0 0.0
        %1100 = vmatpush1.msra.mxu0 0.0
        %1101 = vmatprep.subr.mxu0 0.0
        %1102 = vmatpush1.msra.mxu0 0.0
        %1103 = vmatprep.subr.mxu0 0.0
        %1104 = vmatpush1.msra.mxu0 0.0
        %1105 = vmatprep.subr.mxu0 0.0
        %1106 = vmatpush1.msra.mxu0 0.0
        %1107 = vmatprep.subr.mxu0 0.0
        %1108 = vmatpush1.msra.mxu0 0.0
        %1109 = vmatprep.subr.mxu0 0.0
        %1110 = vmatpush1.msra.mxu0 0.0
        %1111 = vmatprep.subr.mxu0 0.0
        %1112 = vmatpush1.msra.mxu0 0.0
        %1113 = vmatprep.subr.mxu0 0.0
        %1114 = vmatpush1.msra.mxu0 0.0
        %1115 = vmatprep.subr.mxu0 0.0
        %1116 = vmatpush1.msra.mxu0 0.0
        %1117 = vmatprep.subr.mxu0 0.0
        %1118 = vmatpush1.msra.mxu0 0.0
        %1119 = vmatprep.subr.mxu0 0.0
        %1120 = vmatpush1.msra.mxu0 0.0
        %1121 = vmatprep.subr.mxu0 0.0
        %v1122 = vand.u32 %v917, 4294901760
        %v1123 = vsub.f32 %v917, %v1122
        %1124 = vmatpush1.msra.mxu0 %v1123
        %1125 = vmatprep.subr.mxu0 0.0
        %v1126 = vand.u32 %v916, 4294901760
        %v1127 = vsub.f32 %v916, %v1126
        %1128 = vmatpush1.msra.mxu0 %v1127
        %1129 = vmatprep.subr.mxu0 0.0
        %v1130 = vand.u32 %v915, 4294901760
        %v1131 = vsub.f32 %v915, %v1130
        %1132 = vmatpush1.msra.mxu0 %v1131
        %1133 = vmatprep.subr.mxu0 0.0
        %v1134 = vand.u32 %v914, 4294901760
        %v1135 = vsub.f32 %v914, %v1134
        %1136 = vmatpush1.msra.mxu0 %v1135
        %1137 = vmatprep.subr.mxu0 0.0
        %1138 = vmatpush2.msra.mxu0 0.0
        %1139 = vmatprep.subr.mxu0 0.0
        %1140 = vmatpush2.msra.mxu0 0.0
        %1141 = vmatprep.subr.mxu0 0.0
        %1142 = vmatpush2.msra.mxu0 0.0
        %1143 = vmatprep.subr.mxu0 0.0
        %1144 = vmatpush2.msra.mxu0 0.0
        %1145 = vmatprep.subr.mxu0 0.0
        %1146 = vmatpush2.msra.mxu0 0.0
        %1147 = vmatprep.subr.mxu0 0.0
        %1148 = vmatpush2.msra.mxu0 0.0
        %1149 = vmatprep.subr.mxu0 0.0
        %1150 = vmatpush2.msra.mxu0 0.0
        %1151 = vmatprep.subr.mxu0 0.0
        %1152 = vmatpush2.msra.mxu0 0.0
        %1153 = vmatprep.subr.mxu0 0.0
        %1154 = vmatpush2.msra.mxu0 0.0
        %1155 = vmatprep.subr.mxu0 0.0
        %1156 = vmatpush2.msra.mxu0 0.0
        %1157 = vmatprep.subr.mxu0 0.0
        %1158 = vmatpush2.msra.mxu0 0.0
        %1159 = vmatprep.subr.mxu0 0.0
        %1160 = vmatpush2.msra.mxu0 0.0
        %1161 = vmatprep.subr.mxu0 0.0
        %1162 = vmatpush2.msra.mxu0 0.0
        %1163 = vmatprep.subr.mxu0 0.0
        %1164 = vmatpush2.msra.mxu0 0.0
        %1165 = vmatprep.subr.mxu0 0.0
        %1166 = vmatpush2.msra.mxu0 0.0
        %1167 = vmatprep.subr.mxu0 0.0
        %1168 = vmatpush2.msra.mxu0 0.0
        %1169 = vmatprep.mubr.f32.mxu0 0.0
        %v1170 = vand.u32 %v925, 4294901760
        %v1171 = vsub.f32 %v925, %v1170
        %1172 = vmatmul.mubr.f32.gmra.mxu0 %v1171
        %v1173 = vpop.f32.mrf.mxu0
        %v1174 = vadd.f32 %v1094, %v1173
        %v1175 = vpop.f32.mrf.mxu0
        %1176 = vdwg.mxu0
        %1177 = vmatprep.subr.mxu0 0.0
        %1178 = vmatpush1.msra.mxu0 0.0
        %1179 = vmatprep.subr.mxu0 0.0
        %1180 = vmatpush1.msra.mxu0 0.0
        %1181 = vmatprep.subr.mxu0 0.0
        %1182 = vmatpush1.msra.mxu0 0.0
        %1183 = vmatprep.subr.mxu0 0.0
        %1184 = vmatpush1.msra.mxu0 0.0
        %1185 = vmatprep.subr.mxu0 0.0
        %1186 = vmatpush1.msra.mxu0 0.0
        %1187 = vmatprep.subr.mxu0 0.0
        %1188 = vmatpush1.msra.mxu0 0.0
        %1189 = vmatprep.subr.mxu0 0.0
        %1190 = vmatpush1.msra.mxu0 0.0
        %1191 = vmatprep.subr.mxu0 0.0
        %1192 = vmatpush1.msra.mxu0 0.0
        %1193 = vmatprep.subr.mxu0 0.0
        %1194 = vmatpush1.msra.mxu0 0.0
        %1195 = vmatprep.subr.mxu0 0.0
        %1196 = vmatpush1.msra.mxu0 0.0
        %1197 = vmatprep.subr.mxu0 0.0
        %1198 = vmatpush1.msra.mxu0 0.0
        %1199 = vmatprep.subr.mxu0 0.0
        %1200 = vmatpush1.msra.mxu0 0.0
        %1201 = vmatprep.subr.mxu0 0.0
        %v1202 = vand.u32 %v917, 4294901760
        %1203 = vmatpush1.msra.mxu0 %v1202
        %1204 = vmatprep.subr.mxu0 0.0
        %v1205 = vand.u32 %v916, 4294901760
        %1206 = vmatpush1.msra.mxu0 %v1205
        %1207 = vmatprep.subr.mxu0 0.0
        %v1208 = vand.u32 %v915, 4294901760
        %1209 = vmatpush1.msra.mxu0 %v1208
        %1210 = vmatprep.subr.mxu0 0.0
        %v1211 = vand.u32 %v914, 4294901760
        %1212 = vmatpush1.msra.mxu0 %v1211
        %1213 = vmatprep.subr.mxu0 0.0
        %1214 = vmatpush2.msra.mxu0 0.0
        %1215 = vmatprep.subr.mxu0 0.0
        %1216 = vmatpush2.msra.mxu0 0.0
        %1217 = vmatprep.subr.mxu0 0.0
        %1218 = vmatpush2.msra.mxu0 0.0
        %1219 = vmatprep.subr.mxu0 0.0
        %1220 = vmatpush2.msra.mxu0 0.0
        %1221 = vmatprep.subr.mxu0 0.0
        %1222 = vmatpush2.msra.mxu0 0.0
        %1223 = vmatprep.subr.mxu0 0.0
        %1224 = vmatpush2.msra.mxu0 0.0
        %1225 = vmatprep.subr.mxu0 0.0
        %1226 = vmatpush2.msra.mxu0 0.0
        %1227 = vmatprep.subr.mxu0 0.0
        %1228 = vmatpush2.msra.mxu0 0.0
        %1229 = vmatprep.subr.mxu0 0.0
        %1230 = vmatpush2.msra.mxu0 0.0
        %1231 = vmatprep.subr.mxu0 0.0
        %1232 = vmatpush2.msra.mxu0 0.0
        %1233 = vmatprep.subr.mxu0 0.0
        %1234 = vmatpush2.msra.mxu0 0.0
        %1235 = vmatprep.subr.mxu0 0.0
        %1236 = vmatpush2.msra.mxu0 0.0
        %1237 = vmatprep.subr.mxu0 0.0
        %1238 = vmatpush2.msra.mxu0 0.0
        %1239 = vmatprep.subr.mxu0 0.0
        %1240 = vmatpush2.msra.mxu0 0.0
        %1241 = vmatprep.subr.mxu0 0.0
        %1242 = vmatpush2.msra.mxu0 0.0
        %1243 = vmatprep.subr.mxu0 0.0
        %1244 = vmatpush2.msra.mxu0 0.0
        %1245 = vmatprep.mubr.f32.mxu0 0.0
        %v1246 = vand.u32 %v925, 4294901760
        %v1247 = vsub.f32 %v925, %v1246
        %v1248 = vand.u32 %v1247, 4294901760
        %1249 = vmatmul.mubr.f32.gmra.mxu0 %v1248
        %v1250 = vpop.f32.mrf.mxu0
        %v1251 = vadd.f32 %v1174, %v1250
        %v1252 = vpop.f32.mrf.mxu0
        %1253 = vdwg.mxu0
        %1254 = vmatprep.subr.mxu0 0.0
        %1255 = vmatpush1.msra.mxu0 0.0
        %1256 = vmatprep.subr.mxu0 0.0
        %1257 = vmatpush1.msra.mxu0 0.0
        %1258 = vmatprep.subr.mxu0 0.0
        %1259 = vmatpush1.msra.mxu0 0.0
        %1260 = vmatprep.subr.mxu0 0.0
        %1261 = vmatpush1.msra.mxu0 0.0
        %1262 = vmatprep.subr.mxu0 0.0
        %1263 = vmatpush1.msra.mxu0 0.0
        %1264 = vmatprep.subr.mxu0 0.0
        %1265 = vmatpush1.msra.mxu0 0.0
        %1266 = vmatprep.subr.mxu0 0.0
        %1267 = vmatpush1.msra.mxu0 0.0
        %1268 = vmatprep.subr.mxu0 0.0
        %1269 = vmatpush1.msra.mxu0 0.0
        %1270 = vmatprep.subr.mxu0 0.0
        %1271 = vmatpush1.msra.mxu0 0.0
        %1272 = vmatprep.subr.mxu0 0.0
        %1273 = vmatpush1.msra.mxu0 0.0
        %1274 = vmatprep.subr.mxu0 0.0
        %1275 = vmatpush1.msra.mxu0 0.0
        %1276 = vmatprep.subr.mxu0 0.0
        %1277 = vmatpush1.msra.mxu0 0.0
        %1278 = vmatprep.subr.mxu0 0.0
        %v1279 = vand.u32 %v917, 4294901760
        %v1280 = vsub.f32 %v917, %v1279
        %v1281 = vand.u32 %v1280, 4294901760
        %1282 = vmatpush1.msra.mxu0 %v1281
        %1283 = vmatprep.subr.mxu0 0.0
        %v1284 = vand.u32 %v916, 4294901760
        %v1285 = vsub.f32 %v916, %v1284
        %v1286 = vand.u32 %v1285, 4294901760
        %1287 = vmatpush1.msra.mxu0 %v1286
        %1288 = vmatprep.subr.mxu0 0.0
        %v1289 = vand.u32 %v915, 4294901760
        %v1290 = vsub.f32 %v915, %v1289
        %v1291 = vand.u32 %v1290, 4294901760
        %1292 = vmatpush1.msra.mxu0 %v1291
        %1293 = vmatprep.subr.mxu0 0.0
        %v1294 = vand.u32 %v914, 4294901760
        %v1295 = vsub.f32 %v914, %v1294
        %v1296 = vand.u32 %v1295, 4294901760
        %1297 = vmatpush1.msra.mxu0 %v1296
        %1298 = vmatprep.subr.mxu0 0.0
        %1299 = vmatpush2.msra.mxu0 0.0
        %1300 = vmatprep.subr.mxu0 0.0
        %1301 = vmatpush2.msra.mxu0 0.0
        %1302 = vmatprep.subr.mxu0 0.0
        %1303 = vmatpush2.msra.mxu0 0.0
        %1304 = vmatprep.subr.mxu0 0.0
        %1305 = vmatpush2.msra.mxu0 0.0
        %1306 = vmatprep.subr.mxu0 0.0
        %1307 = vmatpush2.msra.mxu0 0.0
        %1308 = vmatprep.subr.mxu0 0.0
        %1309 = vmatpush2.msra.mxu0 0.0
        %1310 = vmatprep.subr.mxu0 0.0
        %1311 = vmatpush2.msra.mxu0 0.0
        %1312 = vmatprep.subr.mxu0 0.0
        %1313 = vmatpush2.msra.mxu0 0.0
        %1314 = vmatprep.subr.mxu0 0.0
        %1315 = vmatpush2.msra.mxu0 0.0
        %1316 = vmatprep.subr.mxu0 0.0
        %1317 = vmatpush2.msra.mxu0 0.0
        %1318 = vmatprep.subr.mxu0 0.0
        %1319 = vmatpush2.msra.mxu0 0.0
        %1320 = vmatprep.subr.mxu0 0.0
        %1321 = vmatpush2.msra.mxu0 0.0
        %1322 = vmatprep.subr.mxu0 0.0
        %1323 = vmatpush2.msra.mxu0 0.0
        %1324 = vmatprep.subr.mxu0 0.0
        %1325 = vmatpush2.msra.mxu0 0.0
        %1326 = vmatprep.subr.mxu0 0.0
        %1327 = vmatpush2.msra.mxu0 0.0
        %1328 = vmatprep.subr.mxu0 0.0
        %1329 = vmatpush2.msra.mxu0 0.0
        %1330 = vmatprep.mubr.f32.mxu0 0.0
        %v1331 = vand.u32 %v925, 4294901760
        %1332 = vmatmul.mubr.f32.gmra.mxu0 %v1331
        %v1333 = vpop.f32.mrf.mxu0
        %v1334 = vadd.f32 %v1251, %v1333
        %v1335 = vpop.f32.mrf.mxu0
        %1336 = vdwg.mxu0
        %1337 = vmatprep.subr.mxu0 0.0
        %1338 = vmatpush1.msra.mxu0 0.0
        %1339 = vmatprep.subr.mxu0 0.0
        %1340 = vmatpush1.msra.mxu0 0.0
        %1341 = vmatprep.subr.mxu0 0.0
        %1342 = vmatpush1.msra.mxu0 0.0
        %1343 = vmatprep.subr.mxu0 0.0
        %1344 = vmatpush1.msra.mxu0 0.0
        %1345 = vmatprep.subr.mxu0 0.0
        %1346 = vmatpush1.msra.mxu0 0.0
        %1347 = vmatprep.subr.mxu0 0.0
        %1348 = vmatpush1.msra.mxu0 0.0
        %1349 = vmatprep.subr.mxu0 0.0
        %1350 = vmatpush1.msra.mxu0 0.0
        %1351 = vmatprep.subr.mxu0 0.0
        %1352 = vmatpush1.msra.mxu0 0.0
        %1353 = vmatprep.subr.mxu0 0.0
        %1354 = vmatpush1.msra.mxu0 0.0
        %1355 = vmatprep.subr.mxu0 0.0
        %1356 = vmatpush1.msra.mxu0 0.0
        %1357 = vmatprep.subr.mxu0 0.0
        %1358 = vmatpush1.msra.mxu0 0.0
        %1359 = vmatprep.subr.mxu0 0.0
        %1360 = vmatpush1.msra.mxu0 0.0
        %1361 = vmatprep.subr.mxu0 0.0
        %v1362 = vand.u32 %v917, 4294901760
        %1363 = vmatpush1.msra.mxu0 %v1362
        %1364 = vmatprep.subr.mxu0 0.0
        %v1365 = vand.u32 %v916, 4294901760
        %1366 = vmatpush1.msra.mxu0 %v1365
        %1367 = vmatprep.subr.mxu0 0.0
        %v1368 = vand.u32 %v915, 4294901760
        %1369 = vmatpush1.msra.mxu0 %v1368
        %1370 = vmatprep.subr.mxu0 0.0
        %v1371 = vand.u32 %v914, 4294901760
        %1372 = vmatpush1.msra.mxu0 %v1371
        %1373 = vmatprep.subr.mxu0 0.0
        %1374 = vmatpush2.msra.mxu0 0.0
        %1375 = vmatprep.subr.mxu0 0.0
        %1376 = vmatpush2.msra.mxu0 0.0
        %1377 = vmatprep.subr.mxu0 0.0
        %1378 = vmatpush2.msra.mxu0 0.0
        %1379 = vmatprep.subr.mxu0 0.0
        %1380 = vmatpush2.msra.mxu0 0.0
        %1381 = vmatprep.subr.mxu0 0.0
        %1382 = vmatpush2.msra.mxu0 0.0
        %1383 = vmatprep.subr.mxu0 0.0
        %1384 = vmatpush2.msra.mxu0 0.0
        %1385 = vmatprep.subr.mxu0 0.0
        %1386 = vmatpush2.msra.mxu0 0.0
        %1387 = vmatprep.subr.mxu0 0.0
        %1388 = vmatpush2.msra.mxu0 0.0
        %1389 = vmatprep.subr.mxu0 0.0
        %1390 = vmatpush2.msra.mxu0 0.0
        %1391 = vmatprep.subr.mxu0 0.0
        %1392 = vmatpush2.msra.mxu0 0.0
        %1393 = vmatprep.subr.mxu0 0.0
        %1394 = vmatpush2.msra.mxu0 0.0
        %1395 = vmatprep.subr.mxu0 0.0
        %1396 = vmatpush2.msra.mxu0 0.0
        %1397 = vmatprep.subr.mxu0 0.0
        %1398 = vmatpush2.msra.mxu0 0.0
        %1399 = vmatprep.subr.mxu0 0.0
        %1400 = vmatpush2.msra.mxu0 0.0
        %1401 = vmatprep.subr.mxu0 0.0
        %1402 = vmatpush2.msra.mxu0 0.0
        %1403 = vmatprep.subr.mxu0 0.0
        %1404 = vmatpush2.msra.mxu0 0.0
        %1405 = vmatprep.mubr.f32.mxu0 0.0
        %v1406 = vand.u32 %v925, 4294901760
        %1407 = vmatmul.mubr.f32.gmra.mxu0 %v1406
        %v1408 = vpop.f32.mrf.mxu0
        %v1409 = vadd.f32 %v1334, %v1408
        %v1410 = vpop.f32.mrf.mxu0
        %1411 = vdwg.mxu0
        %v1412 = vmax.f32 %v1409, 0.0
        %v1413 = vld [vmem:[%s3] sm:$0xff]
        %v1414 = vld [vmem:[%s3 + $0x8] sm:$0xff]
        %v1415 = vld [vmem:[%s5 + $0x2] sm:$0x1]
        %v1416 = vlaneseq
        %v1417 = vshrl.u32 %v1416, 7
        %v1418 = vsub.s32 0, %v1417
        %v1419 = vrot.slane %v1415, %v1418
        %vm1420 = vcmask 130048
        %v1422 = vsel %vm1420, %v1412, 0
        %1424 = vmatprep.subr.mxu0 0.0
        %1425 = vmatpush1.msra.mxu0 0.0
        %1426 = vmatprep.subr.mxu0 0.0
        %1427 = vmatpush1.msra.mxu0 0.0
        %1428 = vmatprep.subr.mxu0 0.0
        %1429 = vmatpush1.msra.mxu0 0.0
        %1430 = vmatprep.subr.mxu0 0.0
        %1431 = vmatpush1.msra.mxu0 0.0
        %1432 = vmatprep.subr.mxu0 0.0
        %1433 = vmatpush1.msra.mxu0 0.0
        %1434 = vmatprep.subr.mxu0 0.0
        %1435 = vmatpush1.msra.mxu0 0.0
        %1436 = vmatprep.subr.mxu0 0.0
        %1437 = vmatpush1.msra.mxu0 0.0
        %1438 = vmatprep.subr.mxu0 0.0
        %1439 = vmatpush1.msra.mxu0 0.0
        %1440 = vmatprep.subr.mxu0 0.0
        %1441 = vmatpush1.msra.mxu0 0.0
        %1442 = vmatprep.subr.mxu0 0.0
        %1443 = vmatpush1.msra.mxu0 0.0
        %1444 = vmatprep.subr.mxu0 0.0
        %1445 = vmatpush1.msra.mxu0 0.0
        %1446 = vmatprep.subr.mxu0 0.0
        %1447 = vmatpush1.msra.mxu0 0.0
        %1448 = vmatprep.subr.mxu0 0.0
        %1449 = vmatpush1.msra.mxu0 0.0
        %1450 = vmatprep.subr.mxu0 0.0
        %1451 = vmatpush1.msra.mxu0 0.0
        %1452 = vmatprep.subr.mxu0 0.0
        %v1453 = vand.u32 %v1414, 4294901760
        %1454 = vmatpush1.msra.mxu0 %v1453
        %1455 = vmatprep.subr.mxu0 0.0
        %v1456 = vand.u32 %v1413, 4294901760
        %1457 = vmatpush1.msra.mxu0 %v1456
        %1458 = vmatprep.subr.mxu0 0.0
        %1459 = vmatpush2.msra.mxu0 0.0
        %1460 = vmatprep.subr.mxu0 0.0
        %1461 = vmatpush2.msra.mxu0 0.0
        %1462 = vmatprep.subr.mxu0 0.0
        %1463 = vmatpush2.msra.mxu0 0.0
        %1464 = vmatprep.subr.mxu0 0.0
        %1465 = vmatpush2.msra.mxu0 0.0
        %1466 = vmatprep.subr.mxu0 0.0
        %1467 = vmatpush2.msra.mxu0 0.0
        %1468 = vmatprep.subr.mxu0 0.0
        %1469 = vmatpush2.msra.mxu0 0.0
        %1470 = vmatprep.subr.mxu0 0.0
        %1471 = vmatpush2.msra.mxu0 0.0
        %1472 = vmatprep.subr.mxu0 0.0
        %1473 = vmatpush2.msra.mxu0 0.0
        %1474 = vmatprep.subr.mxu0 0.0
        %1475 = vmatpush2.msra.mxu0 0.0
        %1476 = vmatprep.subr.mxu0 0.0
        %1477 = vmatpush2.msra.mxu0 0.0
        %1478 = vmatprep.subr.mxu0 0.0
        %1479 = vmatpush2.msra.mxu0 0.0
        %1480 = vmatprep.subr.mxu0 0.0
        %1481 = vmatpush2.msra.mxu0 0.0
        %1482 = vmatprep.subr.mxu0 0.0
        %1483 = vmatpush2.msra.mxu0 0.0
        %1484 = vmatprep.subr.mxu0 0.0
        %1485 = vmatpush2.msra.mxu0 0.0
        %1486 = vmatprep.subr.mxu0 0.0
        %1487 = vmatpush2.msra.mxu0 0.0
        %1488 = vmatprep.subr.mxu0 0.0
        %1489 = vmatpush2.msra.mxu0 0.0
        %1490 = vmatprep.mubr.f32.mxu0 0.0
        %v1491 = vand.u32 %v1422, 4294901760
        %v1492 = vsub.f32 %v1422, %v1491
        %v1493 = vand.u32 %v1492, 4294901760
        %v1494 = vsub.f32 %v1492, %v1493
        %v1495 = vand.u32 %v1494, 4294901760
        %1496 = vmatmul.mubr.f32.gmra.mxu0 %v1495
        %v1497 = vpop.f32.mrf.mxu0
        %v1498 = vadd.f32 %v1419, %v1497
        %v1499 = vpop.f32.mrf.mxu0
        %1500 = vdwg.mxu0
        %1501 = vmatprep.subr.mxu0 0.0
        %1502 = vmatpush1.msra.mxu0 0.0
        %1503 = vmatprep.subr.mxu0 0.0
        %1504 = vmatpush1.msra.mxu0 0.0
        %1505 = vmatprep.subr.mxu0 0.0
        %1506 = vmatpush1.msra.mxu0 0.0
        %1507 = vmatprep.subr.mxu0 0.0
        %1508 = vmatpush1.msra.mxu0 0.0
        %1509 = vmatprep.subr.mxu0 0.0
        %1510 = vmatpush1.msra.mxu0 0.0
        %1511 = vmatprep.subr.mxu0 0.0
        %1512 = vmatpush1.msra.mxu0 0.0
        %1513 = vmatprep.subr.mxu0 0.0
        %1514 = vmatpush1.msra.mxu0 0.0
        %1515 = vmatprep.subr.mxu0 0.0
        %1516 = vmatpush1.msra.mxu0 0.0
        %1517 = vmatprep.subr.mxu0 0.0
        %1518 = vmatpush1.msra.mxu0 0.0
        %1519 = vmatprep.subr.mxu0 0.0
        %1520 = vmatpush1.msra.mxu0 0.0
        %1521 = vmatprep.subr.mxu0 0.0
        %1522 = vmatpush1.msra.mxu0 0.0
        %1523 = vmatprep.subr.mxu0 0.0
        %1524 = vmatpush1.msra.mxu0 0.0
        %1525 = vmatprep.subr.mxu0 0.0
        %1526 = vmatpush1.msra.mxu0 0.0
        %1527 = vmatprep.subr.mxu0 0.0
        %1528 = vmatpush1.msra.mxu0 0.0
        %1529 = vmatprep.subr.mxu0 0.0
        %v1530 = vand.u32 %v1414, 4294901760
        %v1531 = vsub.f32 %v1414, %v1530
        %v1532 = vand.u32 %v1531, 4294901760
        %v1533 = vsub.f32 %v1531, %v1532
        %v1534 = vand.u32 %v1533, 4294901760
        %1535 = vmatpush1.msra.mxu0 %v1534
        %1536 = vmatprep.subr.mxu0 0.0
        %v1537 = vand.u32 %v1413, 4294901760
        %v1538 = vsub.f32 %v1413, %v1537
        %v1539 = vand.u32 %v1538, 4294901760
        %v1540 = vsub.f32 %v1538, %v1539
        %v1541 = vand.u32 %v1540, 4294901760
        %1542 = vmatpush1.msra.mxu0 %v1541
        %1543 = vmatprep.subr.mxu0 0.0
        %1544 = vmatpush2.msra.mxu0 0.0
        %1545 = vmatprep.subr.mxu0 0.0
        %1546 = vmatpush2.msra.mxu0 0.0
        %1547 = vmatprep.subr.mxu0 0.0
        %1548 = vmatpush2.msra.mxu0 0.0
        %1549 = vmatprep.subr.mxu0 0.0
        %1550 = vmatpush2.msra.mxu0 0.0
        %1551 = vmatprep.subr.mxu0 0.0
        %1552 = vmatpush2.msra.mxu0 0.0
        %1553 = vmatprep.subr.mxu0 0.0
        %1554 = vmatpush2.msra.mxu0 0.0
        %1555 = vmatprep.subr.mxu0 0.0
        %1556 = vmatpush2.msra.mxu0 0.0
        %1557 = vmatprep.subr.mxu0 0.0
        %1558 = vmatpush2.msra.mxu0 0.0
        %1559 = vmatprep.subr.mxu0 0.0
        %1560 = vmatpush2.msra.mxu0 0.0
        %1561 = vmatprep.subr.mxu0 0.0
        %1562 = vmatpush2.msra.mxu0 0.0
        %1563 = vmatprep.subr.mxu0 0.0
        %1564 = vmatpush2.msra.mxu0 0.0
        %1565 = vmatprep.subr.mxu0 0.0
        %1566 = vmatpush2.msra.mxu0 0.0
        %1567 = vmatprep.subr.mxu0 0.0
        %1568 = vmatpush2.msra.mxu0 0.0
        %1569 = vmatprep.subr.mxu0 0.0
        %1570 = vmatpush2.msra.mxu0 0.0
        %1571 = vmatprep.subr.mxu0 0.0
        %1572 = vmatpush2.msra.mxu0 0.0
        %1573 = vmatprep.subr.mxu0 0.0
        %1574 = vmatpush2.msra.mxu0 0.0
        %1575 = vmatprep.mubr.f32.mxu0 0.0
        %v1576 = vand.u32 %v1422, 4294901760
        %1577 = vmatmul.mubr.f32.gmra.mxu0 %v1576
        %v1578 = vpop.f32.mrf.mxu0
        %v1579 = vadd.f32 %v1498, %v1578
        %v1580 = vpop.f32.mrf.mxu0
        %1581 = vdwg.mxu0
        %1582 = vmatprep.subr.mxu0 0.0
        %1583 = vmatpush1.msra.mxu0 0.0
        %1584 = vmatprep.subr.mxu0 0.0
        %1585 = vmatpush1.msra.mxu0 0.0
        %1586 = vmatprep.subr.mxu0 0.0
        %1587 = vmatpush1.msra.mxu0 0.0
        %1588 = vmatprep.subr.mxu0 0.0
        %1589 = vmatpush1.msra.mxu0 0.0
        %1590 = vmatprep.subr.mxu0 0.0
        %1591 = vmatpush1.msra.mxu0 0.0
        %1592 = vmatprep.subr.mxu0 0.0
        %1593 = vmatpush1.msra.mxu0 0.0
        %1594 = vmatprep.subr.mxu0 0.0
        %1595 = vmatpush1.msra.mxu0 0.0
        %1596 = vmatprep.subr.mxu0 0.0
        %1597 = vmatpush1.msra.mxu0 0.0
        %1598 = vmatprep.subr.mxu0 0.0
        %1599 = vmatpush1.msra.mxu0 0.0
        %1600 = vmatprep.subr.mxu0 0.0
        %1601 = vmatpush1.msra.mxu0 0.0
        %1602 = vmatprep.subr.mxu0 0.0
        %1603 = vmatpush1.msra.mxu0 0.0
        %1604 = vmatprep.subr.mxu0 0.0
        %1605 = vmatpush1.msra.mxu0 0.0
        %1606 = vmatprep.subr.mxu0 0.0
        %1607 = vmatpush1.msra.mxu0 0.0
        %1608 = vmatprep.subr.mxu0 0.0
        %1609 = vmatpush1.msra.mxu0 0.0
        %1610 = vmatprep.subr.mxu0 0.0
        %v1611 = vand.u32 %v1414, 4294901760
        %v1612 = vsub.f32 %v1414, %v1611
        %1613 = vmatpush1.msra.mxu0 %v1612
        %1614 = vmatprep.subr.mxu0 0.0
        %v1615 = vand.u32 %v1413, 4294901760
        %v1616 = vsub.f32 %v1413, %v1615
        %1617 = vmatpush1.msra.mxu0 %v1616
        %1618 = vmatprep.subr.mxu0 0.0
        %1619 = vmatpush2.msra.mxu0 0.0
        %1620 = vmatprep.subr.mxu0 0.0
        %1621 = vmatpush2.msra.mxu0 0.0
        %1622 = vmatprep.subr.mxu0 0.0
        %1623 = vmatpush2.msra.mxu0 0.0
        %1624 = vmatprep.subr.mxu0 0.0
        %1625 = vmatpush2.msra.mxu0 0.0
        %1626 = vmatprep.subr.mxu0 0.0
        %1627 = vmatpush2.msra.mxu0 0.0
        %1628 = vmatprep.subr.mxu0 0.0
        %1629 = vmatpush2.msra.mxu0 0.0
        %1630 = vmatprep.subr.mxu0 0.0
        %1631 = vmatpush2.msra.mxu0 0.0
        %1632 = vmatprep.subr.mxu0 0.0
        %1633 = vmatpush2.msra.mxu0 0.0
        %1634 = vmatprep.subr.mxu0 0.0
        %1635 = vmatpush2.msra.mxu0 0.0
        %1636 = vmatprep.subr.mxu0 0.0
        %1637 = vmatpush2.msra.mxu0 0.0
        %1638 = vmatprep.subr.mxu0 0.0
        %1639 = vmatpush2.msra.mxu0 0.0
        %1640 = vmatprep.subr.mxu0 0.0
        %1641 = vmatpush2.msra.mxu0 0.0
        %1642 = vmatprep.subr.mxu0 0.0
        %1643 = vmatpush2.msra.mxu0 0.0
        %1644 = vmatprep.subr.mxu0 0.0
        %1645 = vmatpush2.msra.mxu0 0.0
        %1646 = vmatprep.subr.mxu0 0.0
        %1647 = vmatpush2.msra.mxu0 0.0
        %1648 = vmatprep.subr.mxu0 0.0
        %1649 = vmatpush2.msra.mxu0 0.0
        %1650 = vmatprep.mubr.f32.mxu0 0.0
        %v1651 = vand.u32 %v1422, 4294901760
        %v1652 = vsub.f32 %v1422, %v1651
        %1653 = vmatmul.mubr.f32.gmra.mxu0 %v1652
        %v1654 = vpop.f32.mrf.mxu0
        %v1655 = vadd.f32 %v1579, %v1654
        %v1656 = vpop.f32.mrf.mxu0
        %1657 = vdwg.mxu0
        %1658 = vmatprep.subr.mxu0 0.0
        %1659 = vmatpush1.msra.mxu0 0.0
        %1660 = vmatprep.subr.mxu0 0.0
        %1661 = vmatpush1.msra.mxu0 0.0
        %1662 = vmatprep.subr.mxu0 0.0
        %1663 = vmatpush1.msra.mxu0 0.0
        %1664 = vmatprep.subr.mxu0 0.0
        %1665 = vmatpush1.msra.mxu0 0.0
        %1666 = vmatprep.subr.mxu0 0.0
        %1667 = vmatpush1.msra.mxu0 0.0
        %1668 = vmatprep.subr.mxu0 0.0
        %1669 = vmatpush1.msra.mxu0 0.0
        %1670 = vmatprep.subr.mxu0 0.0
        %1671 = vmatpush1.msra.mxu0 0.0
        %1672 = vmatprep.subr.mxu0 0.0
        %1673 = vmatpush1.msra.mxu0 0.0
        %1674 = vmatprep.subr.mxu0 0.0
        %1675 = vmatpush1.msra.mxu0 0.0
        %1676 = vmatprep.subr.mxu0 0.0
        %1677 = vmatpush1.msra.mxu0 0.0
        %1678 = vmatprep.subr.mxu0 0.0
        %1679 = vmatpush1.msra.mxu0 0.0
        %1680 = vmatprep.subr.mxu0 0.0
        %1681 = vmatpush1.msra.mxu0 0.0
        %1682 = vmatprep.subr.mxu0 0.0
        %1683 = vmatpush1.msra.mxu0 0.0
        %1684 = vmatprep.subr.mxu0 0.0
        %1685 = vmatpush1.msra.mxu0 0.0
        %1686 = vmatprep.subr.mxu0 0.0
        %v1687 = vand.u32 %v1414, 4294901760
        %1688 = vmatpush1.msra.mxu0 %v1687
        %1689 = vmatprep.subr.mxu0 0.0
        %v1690 = vand.u32 %v1413, 4294901760
        %1691 = vmatpush1.msra.mxu0 %v1690
        %1692 = vmatprep.subr.mxu0 0.0
        %1693 = vmatpush2.msra.mxu0 0.0
        %1694 = vmatprep.subr.mxu0 0.0
        %1695 = vmatpush2.msra.mxu0 0.0
        %1696 = vmatprep.subr.mxu0 0.0
        %1697 = vmatpush2.msra.mxu0 0.0
        %1698 = vmatprep.subr.mxu0 0.0
        %1699 = vmatpush2.msra.mxu0 0.0
        %1700 = vmatprep.subr.mxu0 0.0
        %1701 = vmatpush2.msra.mxu0 0.0
        %1702 = vmatprep.subr.mxu0 0.0
        %1703 = vmatpush2.msra.mxu0 0.0
        %1704 = vmatprep.subr.mxu0 0.0
        %1705 = vmatpush2.msra.mxu0 0.0
        %1706 = vmatprep.subr.mxu0 0.0
        %1707 = vmatpush2.msra.mxu0 0.0
        %1708 = vmatprep.subr.mxu0 0.0
        %1709 = vmatpush2.msra.mxu0 0.0
        %1710 = vmatprep.subr.mxu0 0.0
        %1711 = vmatpush2.msra.mxu0 0.0
        %1712 = vmatprep.subr.mxu0 0.0
        %1713 = vmatpush2.msra.mxu0 0.0
        %1714 = vmatprep.subr.mxu0 0.0
        %1715 = vmatpush2.msra.mxu0 0.0
        %1716 = vmatprep.subr.mxu0 0.0
        %1717 = vmatpush2.msra.mxu0 0.0
        %1718 = vmatprep.subr.mxu0 0.0
        %1719 = vmatpush2.msra.mxu0 0.0
        %1720 = vmatprep.subr.mxu0 0.0
        %1721 = vmatpush2.msra.mxu0 0.0
        %1722 = vmatprep.subr.mxu0 0.0
        %1723 = vmatpush2.msra.mxu0 0.0
        %1724 = vmatprep.mubr.f32.mxu0 0.0
        %v1725 = vand.u32 %v1422, 4294901760
        %v1726 = vsub.f32 %v1422, %v1725
        %v1727 = vand.u32 %v1726, 4294901760
        %1728 = vmatmul.mubr.f32.gmra.mxu0 %v1727
        %v1729 = vpop.f32.mrf.mxu0
        %v1730 = vadd.f32 %v1655, %v1729
        %v1731 = vpop.f32.mrf.mxu0
        %1732 = vdwg.mxu0
        %1733 = vmatprep.subr.mxu0 0.0
        %1734 = vmatpush1.msra.mxu0 0.0
        %1735 = vmatprep.subr.mxu0 0.0
        %1736 = vmatpush1.msra.mxu0 0.0
        %1737 = vmatprep.subr.mxu0 0.0
        %1738 = vmatpush1.msra.mxu0 0.0
        %1739 = vmatprep.subr.mxu0 0.0
        %1740 = vmatpush1.msra.mxu0 0.0
        %1741 = vmatprep.subr.mxu0 0.0
        %1742 = vmatpush1.msra.mxu0 0.0
        %1743 = vmatprep.subr.mxu0 0.0
        %1744 = vmatpush1.msra.mxu0 0.0
        %1745 = vmatprep.subr.mxu0 0.0
        %1746 = vmatpush1.msra.mxu0 0.0
        %1747 = vmatprep.subr.mxu0 0.0
        %1748 = vmatpush1.msra.mxu0 0.0
        %1749 = vmatprep.subr.mxu0 0.0
        %1750 = vmatpush1.msra.mxu0 0.0
        %1751 = vmatprep.subr.mxu0 0.0
        %1752 = vmatpush1.msra.mxu0 0.0
        %1753 = vmatprep.subr.mxu0 0.0
        %1754 = vmatpush1.msra.mxu0 0.0
        %1755 = vmatprep.subr.mxu0 0.0
        %1756 = vmatpush1.msra.mxu0 0.0
        %1757 = vmatprep.subr.mxu0 0.0
        %1758 = vmatpush1.msra.mxu0 0.0
        %1759 = vmatprep.subr.mxu0 0.0
        %1760 = vmatpush1.msra.mxu0 0.0
        %1761 = vmatprep.subr.mxu0 0.0
        %v1762 = vand.u32 %v1414, 4294901760
        %v1763 = vsub.f32 %v1414, %v1762
        %v1764 = vand.u32 %v1763, 4294901760
        %1765 = vmatpush1.msra.mxu0 %v1764
        %1766 = vmatprep.subr.mxu0 0.0
        %v1767 = vand.u32 %v1413, 4294901760
        %v1768 = vsub.f32 %v1413, %v1767
        %v1769 = vand.u32 %v1768, 4294901760
        %1770 = vmatpush1.msra.mxu0 %v1769
        %1771 = vmatprep.subr.mxu0 0.0
        %1772 = vmatpush2.msra.mxu0 0.0
        %1773 = vmatprep.subr.mxu0 0.0
        %1774 = vmatpush2.msra.mxu0 0.0
        %1775 = vmatprep.subr.mxu0 0.0
        %1776 = vmatpush2.msra.mxu0 0.0
        %1777 = vmatprep.subr.mxu0 0.0
        %1778 = vmatpush2.msra.mxu0 0.0
        %1779 = vmatprep.subr.mxu0 0.0
        %1780 = vmatpush2.msra.mxu0 0.0
        %1781 = vmatprep.subr.mxu0 0.0
        %1782 = vmatpush2.msra.mxu0 0.0
        %1783 = vmatprep.subr.mxu0 0.0
        %1784 = vmatpush2.msra.mxu0 0.0
        %1785 = vmatprep.subr.mxu0 0.0
        %1786 = vmatpush2.msra.mxu0 0.0
        %1787 = vmatprep.subr.mxu0 0.0
        %1788 = vmatpush2.msra.mxu0 0.0
        %1789 = vmatprep.subr.mxu0 0.0
        %1790 = vmatpush2.msra.mxu0 0.0
        %1791 = vmatprep.subr.mxu0 0.0
        %1792 = vmatpush2.msra.mxu0 0.0
        %1793 = vmatprep.subr.mxu0 0.0
        %1794 = vmatpush2.msra.mxu0 0.0
        %1795 = vmatprep.subr.mxu0 0.0
        %1796 = vmatpush2.msra.mxu0 0.0
        %1797 = vmatprep.subr.mxu0 0.0
        %1798 = vmatpush2.msra.mxu0 0.0
        %1799 = vmatprep.subr.mxu0 0.0
        %1800 = vmatpush2.msra.mxu0 0.0
        %1801 = vmatprep.subr.mxu0 0.0
        %1802 = vmatpush2.msra.mxu0 0.0
        %1803 = vmatprep.mubr.f32.mxu0 0.0
        %v1804 = vand.u32 %v1422, 4294901760
        %1805 = vmatmul.mubr.f32.gmra.mxu0 %v1804
        %v1806 = vpop.f32.mrf.mxu0
        %v1807 = vadd.f32 %v1730, %v1806
        %v1808 = vpop.f32.mrf.mxu0
        %1809 = vdwg.mxu0
        %1810 = vmatprep.subr.mxu0 0.0
        %1811 = vmatpush1.msra.mxu0 0.0
        %1812 = vmatprep.subr.mxu0 0.0
        %1813 = vmatpush1.msra.mxu0 0.0
        %1814 = vmatprep.subr.mxu0 0.0
        %1815 = vmatpush1.msra.mxu0 0.0
        %1816 = vmatprep.subr.mxu0 0.0
        %1817 = vmatpush1.msra.mxu0 0.0
        %1818 = vmatprep.subr.mxu0 0.0
        %1819 = vmatpush1.msra.mxu0 0.0
        %1820 = vmatprep.subr.mxu0 0.0
        %1821 = vmatpush1.msra.mxu0 0.0
        %1822 = vmatprep.subr.mxu0 0.0
        %1823 = vmatpush1.msra.mxu0 0.0
        %1824 = vmatprep.subr.mxu0 0.0
        %1825 = vmatpush1.msra.mxu0 0.0
        %1826 = vmatprep.subr.mxu0 0.0
        %1827 = vmatpush1.msra.mxu0 0.0
        %1828 = vmatprep.subr.mxu0 0.0
        %1829 = vmatpush1.msra.mxu0 0.0
        %1830 = vmatprep.subr.mxu0 0.0
        %1831 = vmatpush1.msra.mxu0 0.0
        %1832 = vmatprep.subr.mxu0 0.0
        %1833 = vmatpush1.msra.mxu0 0.0
        %1834 = vmatprep.subr.mxu0 0.0
        %1835 = vmatpush1.msra.mxu0 0.0
        %1836 = vmatprep.subr.mxu0 0.0
        %1837 = vmatpush1.msra.mxu0 0.0
        %1838 = vmatprep.subr.mxu0 0.0
        %v1839 = vand.u32 %v1414, 4294901760
        %1840 = vmatpush1.msra.mxu0 %v1839
        %1841 = vmatprep.subr.mxu0 0.0
        %v1842 = vand.u32 %v1413, 4294901760
        %1843 = vmatpush1.msra.mxu0 %v1842
        %1844 = vmatprep.subr.mxu0 0.0
        %1845 = vmatpush2.msra.mxu0 0.0
        %1846 = vmatprep.subr.mxu0 0.0
        %1847 = vmatpush2.msra.mxu0 0.0
        %1848 = vmatprep.subr.mxu0 0.0
        %1849 = vmatpush2.msra.mxu0 0.0
        %1850 = vmatprep.subr.mxu0 0.0
        %1851 = vmatpush2.msra.mxu0 0.0
        %1852 = vmatprep.subr.mxu0 0.0
        %1853 = vmatpush2.msra.mxu0 0.0
        %1854 = vmatprep.subr.mxu0 0.0
        %1855 = vmatpush2.msra.mxu0 0.0
        %1856 = vmatprep.subr.mxu0 0.0
        %1857 = vmatpush2.msra.mxu0 0.0
        %1858 = vmatprep.subr.mxu0 0.0
        %1859 = vmatpush2.msra.mxu0 0.0
        %1860 = vmatprep.subr.mxu0 0.0
        %1861 = vmatpush2.msra.mxu0 0.0
        %1862 = vmatprep.subr.mxu0 0.0
        %1863 = vmatpush2.msra.mxu0 0.0
        %1864 = vmatprep.subr.mxu0 0.0
        %1865 = vmatpush2.msra.mxu0 0.0
        %1866 = vmatprep.subr.mxu0 0.0
        %1867 = vmatpush2.msra.mxu0 0.0
        %1868 = vmatprep.subr.mxu0 0.0
        %1869 = vmatpush2.msra.mxu0 0.0
        %1870 = vmatprep.subr.mxu0 0.0
        %1871 = vmatpush2.msra.mxu0 0.0
        %1872 = vmatprep.subr.mxu0 0.0
        %1873 = vmatpush2.msra.mxu0 0.0
        %1874 = vmatprep.subr.mxu0 0.0
        %1875 = vmatpush2.msra.mxu0 0.0
        %1876 = vmatprep.mubr.f32.mxu0 0.0
        %v1877 = vand.u32 %v1422, 4294901760
        %1878 = vmatmul.mubr.f32.gmra.mxu0 %v1877
        %v1879 = vpop.f32.mrf.mxu0
        %v1880 = vadd.f32 %v1807, %v1879
        %v1881 = vpop.f32.mrf.mxu0
        %1882 = vdwg.mxu0
        %v1883 = vmax.f32 %v1880, 0.0
        %v1884 = vld [vmem:[%s4] sm:$0xff]
        %v1885 = vld [vmem:[%s4 + $0x8] sm:$0xff]
        %v1886 = vld [vmem:[%s4 + $0x10] sm:$0xff]
        %v1887 = vld [vmem:[%s4 + $0x18] sm:$0xff]
        %v1888 = vld [vmem:[%s5 + $0x3] sm:$0x1]
        %v1889 = vlaneseq
        %v1890 = vshrl.u32 %v1889, 7
        %v1891 = vsub.s32 0, %v1890
        %v1892 = vrot.slane %v1888, %v1891
        %v1894 = vsel %vm923, %v1883, 0
        %1896 = vmatprep.subr.mxu0 0.0
        %1897 = vmatpush1.msra.mxu0 0.0
        %1898 = vmatprep.subr.mxu0 0.0
        %1899 = vmatpush1.msra.mxu0 0.0
        %1900 = vmatprep.subr.mxu0 0.0
        %1901 = vmatpush1.msra.mxu0 0.0
        %1902 = vmatprep.subr.mxu0 0.0
        %1903 = vmatpush1.msra.mxu0 0.0
        %1904 = vmatprep.subr.mxu0 0.0
        %1905 = vmatpush1.msra.mxu0 0.0
        %1906 = vmatprep.subr.mxu0 0.0
        %1907 = vmatpush1.msra.mxu0 0.0
        %1908 = vmatprep.subr.mxu0 0.0
        %1909 = vmatpush1.msra.mxu0 0.0
        %1910 = vmatprep.subr.mxu0 0.0
        %1911 = vmatpush1.msra.mxu0 0.0
        %1912 = vmatprep.subr.mxu0 0.0
        %1913 = vmatpush1.msra.mxu0 0.0
        %1914 = vmatprep.subr.mxu0 0.0
        %1915 = vmatpush1.msra.mxu0 0.0
        %1916 = vmatprep.subr.mxu0 0.0
        %1917 = vmatpush1.msra.mxu0 0.0
        %1918 = vmatprep.subr.mxu0 0.0
        %1919 = vmatpush1.msra.mxu0 0.0
        %1920 = vmatprep.subr.mxu0 0.0
        %v1921 = vand.u32 %v1887, 4294901760
        %1922 = vmatpush1.msra.mxu0 %v1921
        %1923 = vmatprep.subr.mxu0 0.0
        %v1924 = vand.u32 %v1886, 4294901760
        %1925 = vmatpush1.msra.mxu0 %v1924
        %1926 = vmatprep.subr.mxu0 0.0
        %v1927 = vand.u32 %v1885, 4294901760
        %1928 = vmatpush1.msra.mxu0 %v1927
        %1929 = vmatprep.subr.mxu0 0.0
        %v1930 = vand.u32 %v1884, 4294901760
        %1931 = vmatpush1.msra.mxu0 %v1930
        %1932 = vmatprep.subr.mxu0 0.0
        %1933 = vmatpush2.msra.mxu0 0.0
        %1934 = vmatprep.subr.mxu0 0.0
        %1935 = vmatpush2.msra.mxu0 0.0
        %1936 = vmatprep.subr.mxu0 0.0
        %1937 = vmatpush2.msra.mxu0 0.0
        %1938 = vmatprep.subr.mxu0 0.0
        %1939 = vmatpush2.msra.mxu0 0.0
        %1940 = vmatprep.subr.mxu0 0.0
        %1941 = vmatpush2.msra.mxu0 0.0
        %1942 = vmatprep.subr.mxu0 0.0
        %1943 = vmatpush2.msra.mxu0 0.0
        %1944 = vmatprep.subr.mxu0 0.0
        %1945 = vmatpush2.msra.mxu0 0.0
        %1946 = vmatprep.subr.mxu0 0.0
        %1947 = vmatpush2.msra.mxu0 0.0
        %1948 = vmatprep.subr.mxu0 0.0
        %1949 = vmatpush2.msra.mxu0 0.0
        %1950 = vmatprep.subr.mxu0 0.0
        %1951 = vmatpush2.msra.mxu0 0.0
        %1952 = vmatprep.subr.mxu0 0.0
        %1953 = vmatpush2.msra.mxu0 0.0
        %1954 = vmatprep.subr.mxu0 0.0
        %1955 = vmatpush2.msra.mxu0 0.0
        %1956 = vmatprep.subr.mxu0 0.0
        %1957 = vmatpush2.msra.mxu0 0.0
        %1958 = vmatprep.subr.mxu0 0.0
        %1959 = vmatpush2.msra.mxu0 0.0
        %1960 = vmatprep.subr.mxu0 0.0
        %1961 = vmatpush2.msra.mxu0 0.0
        %1962 = vmatprep.subr.mxu0 0.0
        %1963 = vmatpush2.msra.mxu0 0.0
        %1964 = vmatprep.mubr.f32.mxu0 0.0
        %v1965 = vand.u32 %v1894, 4294901760
        %v1966 = vsub.f32 %v1894, %v1965
        %v1967 = vand.u32 %v1966, 4294901760
        %v1968 = vsub.f32 %v1966, %v1967
        %v1969 = vand.u32 %v1968, 4294901760
        %1970 = vmatmul.mubr.f32.gmra.mxu0 %v1969
        %v1971 = vpop.f32.mrf.mxu0
        %v1972 = vadd.f32 %v1892, %v1971
        %v1973 = vpop.f32.mrf.mxu0
        %1974 = vdwg.mxu0
        %1975 = vmatprep.subr.mxu0 0.0
        %1976 = vmatpush1.msra.mxu0 0.0
        %1977 = vmatprep.subr.mxu0 0.0
        %1978 = vmatpush1.msra.mxu0 0.0
        %1979 = vmatprep.subr.mxu0 0.0
        %1980 = vmatpush1.msra.mxu0 0.0
        %1981 = vmatprep.subr.mxu0 0.0
        %1982 = vmatpush1.msra.mxu0 0.0
        %1983 = vmatprep.subr.mxu0 0.0
        %1984 = vmatpush1.msra.mxu0 0.0
        %1985 = vmatprep.subr.mxu0 0.0
        %1986 = vmatpush1.msra.mxu0 0.0
        %1987 = vmatprep.subr.mxu0 0.0
        %1988 = vmatpush1.msra.mxu0 0.0
        %1989 = vmatprep.subr.mxu0 0.0
        %1990 = vmatpush1.msra.mxu0 0.0
        %1991 = vmatprep.subr.mxu0 0.0
        %1992 = vmatpush1.msra.mxu0 0.0
        %1993 = vmatprep.subr.mxu0 0.0
        %1994 = vmatpush1.msra.mxu0 0.0
        %1995 = vmatprep.subr.mxu0 0.0
        %1996 = vmatpush1.msra.mxu0 0.0
        %1997 = vmatprep.subr.mxu0 0.0
        %1998 = vmatpush1.msra.mxu0 0.0
        %1999 = vmatprep.subr.mxu0 0.0
        %v2000 = vand.u32 %v1887, 4294901760
        %v2001 = vsub.f32 %v1887, %v2000
        %v2002 = vand.u32 %v2001, 4294901760
        %v2003 = vsub.f32 %v2001, %v2002
        %v2004 = vand.u32 %v2003, 4294901760
        %2005 = vmatpush1.msra.mxu0 %v2004
        %2006 = vmatprep.subr.mxu0 0.0
        %v2007 = vand.u32 %v1886, 4294901760
        %v2008 = vsub.f32 %v1886, %v2007
        %v2009 = vand.u32 %v2008, 4294901760
        %v2010 = vsub.f32 %v2008, %v2009
        %v2011 = vand.u32 %v2010, 4294901760
        %2012 = vmatpush1.msra.mxu0 %v2011
        %2013 = vmatprep.subr.mxu0 0.0
        %v2014 = vand.u32 %v1885, 4294901760
        %v2015 = vsub.f32 %v1885, %v2014
        %v2016 = vand.u32 %v2015, 4294901760
        %v2017 = vsub.f32 %v2015, %v2016
        %v2018 = vand.u32 %v2017, 4294901760
        %2019 = vmatpush1.msra.mxu0 %v2018
        %2020 = vmatprep.subr.mxu0 0.0
        %v2021 = vand.u32 %v1884, 4294901760
        %v2022 = vsub.f32 %v1884, %v2021
        %v2023 = vand.u32 %v2022, 4294901760
        %v2024 = vsub.f32 %v2022, %v2023
        %v2025 = vand.u32 %v2024, 4294901760
        %2026 = vmatpush1.msra.mxu0 %v2025
        %2027 = vmatprep.subr.mxu0 0.0
        %2028 = vmatpush2.msra.mxu0 0.0
        %2029 = vmatprep.subr.mxu0 0.0
        %2030 = vmatpush2.msra.mxu0 0.0
        %2031 = vmatprep.subr.mxu0 0.0
        %2032 = vmatpush2.msra.mxu0 0.0
        %2033 = vmatprep.subr.mxu0 0.0
        %2034 = vmatpush2.msra.mxu0 0.0
        %2035 = vmatprep.subr.mxu0 0.0
        %2036 = vmatpush2.msra.mxu0 0.0
        %2037 = vmatprep.subr.mxu0 0.0
        %2038 = vmatpush2.msra.mxu0 0.0
        %2039 = vmatprep.subr.mxu0 0.0
        %2040 = vmatpush2.msra.mxu0 0.0
        %2041 = vmatprep.subr.mxu0 0.0
        %2042 = vmatpush2.msra.mxu0 0.0
        %2043 = vmatprep.subr.mxu0 0.0
        %2044 = vmatpush2.msra.mxu0 0.0
        %2045 = vmatprep.subr.mxu0 0.0
        %2046 = vmatpush2.msra.mxu0 0.0
        %2047 = vmatprep.subr.mxu0 0.0
        %2048 = vmatpush2.msra.mxu0 0.0
        %2049 = vmatprep.subr.mxu0 0.0
        %2050 = vmatpush2.msra.mxu0 0.0
        %2051 = vmatprep.subr.mxu0 0.0
        %2052 = vmatpush2.msra.mxu0 0.0
        %2053 = vmatprep.subr.mxu0 0.0
        %2054 = vmatpush2.msra.mxu0 0.0
        %2055 = vmatprep.subr.mxu0 0.0
        %2056 = vmatpush2.msra.mxu0 0.0
        %2057 = vmatprep.subr.mxu0 0.0
        %2058 = vmatpush2.msra.mxu0 0.0
        %2059 = vmatprep.mubr.f32.mxu0 0.0
        %v2060 = vand.u32 %v1894, 4294901760
        %2061 = vmatmul.mubr.f32.gmra.mxu0 %v2060
        %v2062 = vpop.f32.mrf.mxu0
        %v2063 = vadd.f32 %v1972, %v2062
        %v2064 = vpop.f32.mrf.mxu0
        %2065 = vdwg.mxu0
        %2066 = vmatprep.subr.mxu0 0.0
        %2067 = vmatpush1.msra.mxu0 0.0
        %2068 = vmatprep.subr.mxu0 0.0
        %2069 = vmatpush1.msra.mxu0 0.0
        %2070 = vmatprep.subr.mxu0 0.0
        %2071 = vmatpush1.msra.mxu0 0.0
        %2072 = vmatprep.subr.mxu0 0.0
        %2073 = vmatpush1.msra.mxu0 0.0
        %2074 = vmatprep.subr.mxu0 0.0
        %2075 = vmatpush1.msra.mxu0 0.0
        %2076 = vmatprep.subr.mxu0 0.0
        %2077 = vmatpush1.msra.mxu0 0.0
        %2078 = vmatprep.subr.mxu0 0.0
        %2079 = vmatpush1.msra.mxu0 0.0
        %2080 = vmatprep.subr.mxu0 0.0
        %2081 = vmatpush1.msra.mxu0 0.0
        %2082 = vmatprep.subr.mxu0 0.0
        %2083 = vmatpush1.msra.mxu0 0.0
        %2084 = vmatprep.subr.mxu0 0.0
        %2085 = vmatpush1.msra.mxu0 0.0
        %2086 = vmatprep.subr.mxu0 0.0
        %2087 = vmatpush1.msra.mxu0 0.0
        %2088 = vmatprep.subr.mxu0 0.0
        %2089 = vmatpush1.msra.mxu0 0.0
        %2090 = vmatprep.subr.mxu0 0.0
        %v2091 = vand.u32 %v1887, 4294901760
        %v2092 = vsub.f32 %v1887, %v2091
        %2093 = vmatpush1.msra.mxu0 %v2092
        %2094 = vmatprep.subr.mxu0 0.0
        %v2095 = vand.u32 %v1886, 4294901760
        %v2096 = vsub.f32 %v1886, %v2095
        %2097 = vmatpush1.msra.mxu0 %v2096
        %2098 = vmatprep.subr.mxu0 0.0
        %v2099 = vand.u32 %v1885, 4294901760
        %v2100 = vsub.f32 %v1885, %v2099
        %2101 = vmatpush1.msra.mxu0 %v2100
        %2102 = vmatprep.subr.mxu0 0.0
        %v2103 = vand.u32 %v1884, 4294901760
        %v2104 = vsub.f32 %v1884, %v2103
        %2105 = vmatpush1.msra.mxu0 %v2104
        %2106 = vmatprep.subr.mxu0 0.0
        %2107 = vmatpush2.msra.mxu0 0.0
        %2108 = vmatprep.subr.mxu0 0.0
        %2109 = vmatpush2.msra.mxu0 0.0
        %2110 = vmatprep.subr.mxu0 0.0
        %2111 = vmatpush2.msra.mxu0 0.0
        %2112 = vmatprep.subr.mxu0 0.0
        %2113 = vmatpush2.msra.mxu0 0.0
        %2114 = vmatprep.subr.mxu0 0.0
        %2115 = vmatpush2.msra.mxu0 0.0
        %2116 = vmatprep.subr.mxu0 0.0
        %2117 = vmatpush2.msra.mxu0 0.0
        %2118 = vmatprep.subr.mxu0 0.0
        %2119 = vmatpush2.msra.mxu0 0.0
        %2120 = vmatprep.subr.mxu0 0.0
        %2121 = vmatpush2.msra.mxu0 0.0
        %2122 = vmatprep.subr.mxu0 0.0
        %2123 = vmatpush2.msra.mxu0 0.0
        %2124 = vmatprep.subr.mxu0 0.0
        %2125 = vmatpush2.msra.mxu0 0.0
        %2126 = vmatprep.subr.mxu0 0.0
        %2127 = vmatpush2.msra.mxu0 0.0
        %2128 = vmatprep.subr.mxu0 0.0
        %2129 = vmatpush2.msra.mxu0 0.0
        %2130 = vmatprep.subr.mxu0 0.0
        %2131 = vmatpush2.msra.mxu0 0.0
        %2132 = vmatprep.subr.mxu0 0.0
        %2133 = vmatpush2.msra.mxu0 0.0
        %2134 = vmatprep.subr.mxu0 0.0
        %2135 = vmatpush2.msra.mxu0 0.0
        %2136 = vmatprep.subr.mxu0 0.0
        %2137 = vmatpush2.msra.mxu0 0.0
        %2138 = vmatprep.mubr.f32.mxu0 0.0
        %v2139 = vand.u32 %v1894, 4294901760
        %v2140 = vsub.f32 %v1894, %v2139
        %2141 = vmatmul.mubr.f32.gmra.mxu0 %v2140
        %v2142 = vpop.f32.mrf.mxu0
        %v2143 = vadd.f32 %v2063, %v2142
        %v2144 = vpop.f32.mrf.mxu0
        %2145 = vdwg.mxu0
        %2146 = vmatprep.subr.mxu0 0.0
        %2147 = vmatpush1.msra.mxu0 0.0
        %2148 = vmatprep.subr.mxu0 0.0
        %2149 = vmatpush1.msra.mxu0 0.0
        %2150 = vmatprep.subr.mxu0 0.0
        %2151 = vmatpush1.msra.mxu0 0.0
        %2152 = vmatprep.subr.mxu0 0.0
        %2153 = vmatpush1.msra.mxu0 0.0
        %2154 = vmatprep.subr.mxu0 0.0
        %2155 = vmatpush1.msra.mxu0 0.0
        %2156 = vmatprep.subr.mxu0 0.0
        %2157 = vmatpush1.msra.mxu0 0.0
        %2158 = vmatprep.subr.mxu0 0.0
        %2159 = vmatpush1.msra.mxu0 0.0
        %2160 = vmatprep.subr.mxu0 0.0
        %2161 = vmatpush1.msra.mxu0 0.0
        %2162 = vmatprep.subr.mxu0 0.0
        %2163 = vmatpush1.msra.mxu0 0.0
        %2164 = vmatprep.subr.mxu0 0.0
        %2165 = vmatpush1.msra.mxu0 0.0
        %2166 = vmatprep.subr.mxu0 0.0
        %2167 = vmatpush1.msra.mxu0 0.0
        %2168 = vmatprep.subr.mxu0 0.0
        %2169 = vmatpush1.msra.mxu0 0.0
        %2170 = vmatprep.subr.mxu0 0.0
        %v2171 = vand.u32 %v1887, 4294901760
        %2172 = vmatpush1.msra.mxu0 %v2171
        %2173 = vmatprep.subr.mxu0 0.0
        %v2174 = vand.u32 %v1886, 4294901760
        %2175 = vmatpush1.msra.mxu0 %v2174
        %2176 = vmatprep.subr.mxu0 0.0
        %v2177 = vand.u32 %v1885, 4294901760
        %2178 = vmatpush1.msra.mxu0 %v2177
        %2179 = vmatprep.subr.mxu0 0.0
        %v2180 = vand.u32 %v1884, 4294901760
        %2181 = vmatpush1.msra.mxu0 %v2180
        %2182 = vmatprep.subr.mxu0 0.0
        %2183 = vmatpush2.msra.mxu0 0.0
        %2184 = vmatprep.subr.mxu0 0.0
        %2185 = vmatpush2.msra.mxu0 0.0
        %2186 = vmatprep.subr.mxu0 0.0
        %2187 = vmatpush2.msra.mxu0 0.0
        %2188 = vmatprep.subr.mxu0 0.0
        %2189 = vmatpush2.msra.mxu0 0.0
        %2190 = vmatprep.subr.mxu0 0.0
        %2191 = vmatpush2.msra.mxu0 0.0
        %2192 = vmatprep.subr.mxu0 0.0
        %2193 = vmatpush2.msra.mxu0 0.0
        %2194 = vmatprep.subr.mxu0 0.0
        %2195 = vmatpush2.msra.mxu0 0.0
        %2196 = vmatprep.subr.mxu0 0.0
        %2197 = vmatpush2.msra.mxu0 0.0
        %2198 = vmatprep.subr.mxu0 0.0
        %2199 = vmatpush2.msra.mxu0 0.0
        %2200 = vmatprep.subr.mxu0 0.0
        %2201 = vmatpush2.msra.mxu0 0.0
        %2202 = vmatprep.subr.mxu0 0.0
        %2203 = vmatpush2.msra.mxu0 0.0
        %2204 = vmatprep.subr.mxu0 0.0
        %2205 = vmatpush2.msra.mxu0 0.0
        %2206 = vmatprep.subr.mxu0 0.0
        %2207 = vmatpush2.msra.mxu0 0.0
        %2208 = vmatprep.subr.mxu0 0.0
        %2209 = vmatpush2.msra.mxu0 0.0
        %2210 = vmatprep.subr.mxu0 0.0
        %2211 = vmatpush2.msra.mxu0 0.0
        %2212 = vmatprep.subr.mxu0 0.0
        %2213 = vmatpush2.msra.mxu0 0.0
        %2214 = vmatprep.mubr.f32.mxu0 0.0
        %v2215 = vand.u32 %v1894, 4294901760
        %v2216 = vsub.f32 %v1894, %v2215
        %v2217 = vand.u32 %v2216, 4294901760
        %2218 = vmatmul.mubr.f32.gmra.mxu0 %v2217
        %v2219 = vpop.f32.mrf.mxu0
        %v2220 = vadd.f32 %v2143, %v2219
        %v2221 = vpop.f32.mrf.mxu0
        %2222 = vdwg.mxu0
        %2223 = vmatprep.subr.mxu0 0.0
        %2224 = vmatpush1.msra.mxu0 0.0
        %2225 = vmatprep.subr.mxu0 0.0
        %2226 = vmatpush1.msra.mxu0 0.0
        %2227 = vmatprep.subr.mxu0 0.0
        %2228 = vmatpush1.msra.mxu0 0.0
        %2229 = vmatprep.subr.mxu0 0.0
        %2230 = vmatpush1.msra.mxu0 0.0
        %2231 = vmatprep.subr.mxu0 0.0
        %2232 = vmatpush1.msra.mxu0 0.0
        %2233 = vmatprep.subr.mxu0 0.0
        %2234 = vmatpush1.msra.mxu0 0.0
        %2235 = vmatprep.subr.mxu0 0.0
        %2236 = vmatpush1.msra.mxu0 0.0
        %2237 = vmatprep.subr.mxu0 0.0
        %2238 = vmatpush1.msra.mxu0 0.0
        %2239 = vmatprep.subr.mxu0 0.0
        %2240 = vmatpush1.msra.mxu0 0.0
        %2241 = vmatprep.subr.mxu0 0.0
        %2242 = vmatpush1.msra.mxu0 0.0
        %2243 = vmatprep.subr.mxu0 0.0
        %2244 = vmatpush1.msra.mxu0 0.0
        %2245 = vmatprep.subr.mxu0 0.0
        %2246 = vmatpush1.msra.mxu0 0.0
        %2247 = vmatprep.subr.mxu0 0.0
        %v2248 = vand.u32 %v1887, 4294901760
        %v2249 = vsub.f32 %v1887, %v2248
        %v2250 = vand.u32 %v2249, 4294901760
        %2251 = vmatpush1.msra.mxu0 %v2250
        %2252 = vmatprep.subr.mxu0 0.0
        %v2253 = vand.u32 %v1886, 4294901760
        %v2254 = vsub.f32 %v1886, %v2253
        %v2255 = vand.u32 %v2254, 4294901760
        %2256 = vmatpush1.msra.mxu0 %v2255
        %2257 = vmatprep.subr.mxu0 0.0
        %v2258 = vand.u32 %v1885, 4294901760
        %v2259 = vsub.f32 %v1885, %v2258
        %v2260 = vand.u32 %v2259, 4294901760
        %2261 = vmatpush1.msra.mxu0 %v2260
        %2262 = vmatprep.subr.mxu0 0.0
        %v2263 = vand.u32 %v1884, 4294901760
        %v2264 = vsub.f32 %v1884, %v2263
        %v2265 = vand.u32 %v2264, 4294901760
        %2266 = vmatpush1.msra.mxu0 %v2265
        %2267 = vmatprep.subr.mxu0 0.0
        %2268 = vmatpush2.msra.mxu0 0.0
        %2269 = vmatprep.subr.mxu0 0.0
        %2270 = vmatpush2.msra.mxu0 0.0
        %2271 = vmatprep.subr.mxu0 0.0
        %2272 = vmatpush2.msra.mxu0 0.0
        %2273 = vmatprep.subr.mxu0 0.0
        %2274 = vmatpush2.msra.mxu0 0.0
        %2275 = vmatprep.subr.mxu0 0.0
        %2276 = vmatpush2.msra.mxu0 0.0
        %2277 = vmatprep.subr.mxu0 0.0
        %2278 = vmatpush2.msra.mxu0 0.0
        %2279 = vmatprep.subr.mxu0 0.0
        %2280 = vmatpush2.msra.mxu0 0.0
        %2281 = vmatprep.subr.mxu0 0.0
        %2282 = vmatpush2.msra.mxu0 0.0
        %2283 = vmatprep.subr.mxu0 0.0
        %2284 = vmatpush2.msra.mxu0 0.0
        %2285 = vmatprep.subr.mxu0 0.0
        %2286 = vmatpush2.msra.mxu0 0.0
        %2287 = vmatprep.subr.mxu0 0.0
        %2288 = vmatpush2.msra.mxu0 0.0
        %2289 = vmatprep.subr.mxu0 0.0
        %2290 = vmatpush2.msra.mxu0 0.0
        %2291 = vmatprep.subr.mxu0 0.0
        %2292 = vmatpush2.msra.mxu0 0.0
        %2293 = vmatprep.subr.mxu0 0.0
        %2294 = vmatpush2.msra.mxu0 0.0
        %2295 = vmatprep.subr.mxu0 0.0
        %2296 = vmatpush2.msra.mxu0 0.0
        %2297 = vmatprep.subr.mxu0 0.0
        %2298 = vmatpush2.msra.mxu0 0.0
        %2299 = vmatprep.mubr.f32.mxu0 0.0
        %v2300 = vand.u32 %v1894, 4294901760
        %2301 = vmatmul.mubr.f32.gmra.mxu0 %v2300
        %v2302 = vpop.f32.mrf.mxu0
        %v2303 = vadd.f32 %v2220, %v2302
        %v2304 = vpop.f32.mrf.mxu0
        %2305 = vdwg.mxu0
        %2306 = vmatprep.subr.mxu0 0.0
        %2307 = vmatpush1.msra.mxu0 0.0
        %2308 = vmatprep.subr.mxu0 0.0
        %2309 = vmatpush1.msra.mxu0 0.0
        %2310 = vmatprep.subr.mxu0 0.0
        %2311 = vmatpush1.msra.mxu0 0.0
        %2312 = vmatprep.subr.mxu0 0.0
        %2313 = vmatpush1.msra.mxu0 0.0
        %2314 = vmatprep.subr.mxu0 0.0
        %2315 = vmatpush1.msra.mxu0 0.0
        %2316 = vmatprep.subr.mxu0 0.0
        %2317 = vmatpush1.msra.mxu0 0.0
        %2318 = vmatprep.subr.mxu0 0.0
        %2319 = vmatpush1.msra.mxu0 0.0
        %2320 = vmatprep.subr.mxu0 0.0
        %2321 = vmatpush1.msra.mxu0 0.0
        %2322 = vmatprep.subr.mxu0 0.0
        %2323 = vmatpush1.msra.mxu0 0.0
        %2324 = vmatprep.subr.mxu0 0.0
        %2325 = vmatpush1.msra.mxu0 0.0
        %2326 = vmatprep.subr.mxu0 0.0
        %2327 = vmatpush1.msra.mxu0 0.0
        %2328 = vmatprep.subr.mxu0 0.0
        %2329 = vmatpush1.msra.mxu0 0.0
        %2330 = vmatprep.subr.mxu0 0.0
        %v2331 = vand.u32 %v1887, 4294901760
        %2332 = vmatpush1.msra.mxu0 %v2331
        %2333 = vmatprep.subr.mxu0 0.0
        %v2334 = vand.u32 %v1886, 4294901760
        %2335 = vmatpush1.msra.mxu0 %v2334
        %2336 = vmatprep.subr.mxu0 0.0
        %v2337 = vand.u32 %v1885, 4294901760
        %2338 = vmatpush1.msra.mxu0 %v2337
        %2339 = vmatprep.subr.mxu0 0.0
        %v2340 = vand.u32 %v1884, 4294901760
        %2341 = vmatpush1.msra.mxu0 %v2340
        %2342 = vmatprep.subr.mxu0 0.0
        %2343 = vmatpush2.msra.mxu0 0.0
        %2344 = vmatprep.subr.mxu0 0.0
        %2345 = vmatpush2.msra.mxu0 0.0
        %2346 = vmatprep.subr.mxu0 0.0
        %2347 = vmatpush2.msra.mxu0 0.0
        %2348 = vmatprep.subr.mxu0 0.0
        %2349 = vmatpush2.msra.mxu0 0.0
        %2350 = vmatprep.subr.mxu0 0.0
        %2351 = vmatpush2.msra.mxu0 0.0
        %2352 = vmatprep.subr.mxu0 0.0
        %2353 = vmatpush2.msra.mxu0 0.0
        %2354 = vmatprep.subr.mxu0 0.0
        %2355 = vmatpush2.msra.mxu0 0.0
        %2356 = vmatprep.subr.mxu0 0.0
        %2357 = vmatpush2.msra.mxu0 0.0
        %2358 = vmatprep.subr.mxu0 0.0
        %2359 = vmatpush2.msra.mxu0 0.0
        %2360 = vmatprep.subr.mxu0 0.0
        %2361 = vmatpush2.msra.mxu0 0.0
        %2362 = vmatprep.subr.mxu0 0.0
        %2363 = vmatpush2.msra.mxu0 0.0
        %2364 = vmatprep.subr.mxu0 0.0
        %2365 = vmatpush2.msra.mxu0 0.0
        %2366 = vmatprep.subr.mxu0 0.0
        %2367 = vmatpush2.msra.mxu0 0.0
        %2368 = vmatprep.subr.mxu0 0.0
        %2369 = vmatpush2.msra.mxu0 0.0
        %2370 = vmatprep.subr.mxu0 0.0
        %2371 = vmatpush2.msra.mxu0 0.0
        %2372 = vmatprep.subr.mxu0 0.0
        %2373 = vmatpush2.msra.mxu0 0.0
        %2374 = vmatprep.mubr.f32.mxu0 0.0
        %v2375 = vand.u32 %v1894, 4294901760
        %2376 = vmatmul.mubr.f32.gmra.mxu0 %v2375
        %v2377 = vpop.f32.mrf.mxu0
        %v2378 = vadd.f32 %v2303, %v2377
        %v2379 = vpop.f32.mrf.mxu0
        %2380 = vdwg.mxu0
        %v2381 = vmul.f32 %v2378, 0.5
        %v2382 = vtanh.pop %v2381
        %v2383 = vmul.f32 %v2382, 0.5
        %v2384 = vadd.f32 %v2383, 0.5
        %2385 = vst [vmem:[%s242] sm:$0xff] %v2384
        %s2386 = sand.u32 %s159, 1
        %s2387 = scalar_lea.sflag [#allocation3], %s2386
        %s2388 = sand.u32 %s159, 1
        %s2389 = smul.addr %s2388, 8
        %s2390 = scalar_lea.vmem [#allocation2], %s2389
        // Predicated region
        $region45: #{tpu_custom_call.1} parent=43 // pred_check
          %p2391 = pneg %p169
        $region46: #{tpu_custom_call.1} parent=43 // pred_check_branch
          %2393 = sbr.rel (%p2391) target = $region48
        $region47: #{tpu_custom_call.1} parent=43 // pred_region
          %s2395 = ssub.s32 128, 128
          %2396 = vsyncadd %s2387, %s2395
          %s2397 = smul.addr %s20, 128
          %s2398 = scalar_lea.hbm %s6, %s2397
          %s2400 = sshll.u32 %s2390, 4
          %s2401 = int_to_ptr.vmem [resolvable:$true] %s2400
          %2403 = dma.vmem_to_hbm [thread:$0]  %s2401, 128, %s2398, %s2387
        $region48: #{tpu_custom_call.1} parent=43 // pred_fallthru
          _
      $region44: #{tpu_custom_call.1} parent=5 // pred_fallthru
        _
      %p2404 = scmp.le.s32.totalorder 2, %s15
      // Predicated region
      $region49: #{tpu_custom_call.1} parent=5 // pred_check
        %p2405 = pneg %p2404
      $region50: #{tpu_custom_call.1} parent=5 // pred_check_branch
        %2407 = sbr.rel (%p2405) target = $region52
      $region51: #{tpu_custom_call.1} parent=5 // pred_region
        %s2408 = ssub.s32 %s15, 2
        // Predicated region
        $region53: #{tpu_custom_call.1} parent=51 // pred_check
          %p2409 = pneg %p175
        $region54: #{tpu_custom_call.1} parent=51 // pred_check_branch
          %2411 = sbr.rel (%p2409) target = $region56
        $region55: #{tpu_custom_call.1} parent=51 // pred_region
          %s2412 = sand.u32 %s160, 1
          %s2413 = scalar_lea.sflag [#allocation3], %s2412
          %s2414 = sand.u32 %s160, 1
          %s2415 = smul.addr %s2414, 8
          %s2416 = scalar_lea.vmem [#allocation2], %s2415
          %2417 = dma.done %s2413, 128
        $region56: #{tpu_custom_call.1} parent=51 // pred_fallthru
          _
      $region52: #{tpu_custom_call.1} parent=5 // pred_fallthru
        _
    $region6: #{tpu_custom_call.1} parent=1 // loop_footer
      %s19 = sadd.s32 1, %s15
    $region7: #{tpu_custom_call.1} parent=1 // loop_footer_branch
      %14 = sbr.rel target = $region3
    $region8: #{tpu_custom_call.1} parent=1 // loop_exit
      _
    %2418 = vsyncpa [#allocation3], 1
    %s2419 = scalar_lea.sflag [#allocation3], 1
    %2420 = vsyncpa %s2419, 1

</llo_original>
